<compile_context>
chip_gen: v5e
topology: v5e:2x2
jax: 0.10.0
libtpu: 0.0.40
codegen_flags: <defaults>
</compile_context>

<pallas_src>
import jax
import jax.numpy as jnp
from jax.experimental import pallas as pl
from jax.experimental.pallas import tpu as pltpu


# ---------------- Pallas kernels ----------------

def conv_pool(patches, w, b, p8):
    """Fused (im2col GEMM + bias + 2x2 max-pool) over a batch grid.

    patches: (N, 4*p8, K) bf16 -- rows grouped as [pool corner (dy,dx)][pooled pixel],
             each corner slab padded to p8 rows (multiple of 8).
    w:       (K, 128) bf16  (output channels zero-padded to 128 lanes)
    b:       (1, 128) f32
    returns: (N, p8, 128) f32 -- pooled activation, channels in lanes.
    """
    N, R, K = patches.shape
    assert R == 4 * p8

    def kernel(p_ref, w_ref, b_ref, o_ref):
        y = jnp.dot(p_ref[0], w_ref[...],
                    preferred_element_type=jnp.float32) + b_ref[...]
        m = jnp.maximum(jnp.maximum(y[0 * p8:1 * p8], y[1 * p8:2 * p8]),
                        jnp.maximum(y[2 * p8:3 * p8], y[3 * p8:4 * p8]))
        o_ref[0] = m

    return pl.pallas_call(
        kernel,
        out_shape=jax.ShapeDtypeStruct((N, p8, 128), jnp.float32),
        grid=(N,),
        in_specs=[
            pl.BlockSpec((1, R, K), lambda i: (i, 0, 0)),
            pl.BlockSpec((K, 128), lambda i: (0, 0)),
            pl.BlockSpec((1, 128), lambda i: (0, 0)),
        ],
        out_specs=pl.BlockSpec((1, p8, 128), lambda i: (i, 0, 0)),
        compiler_params=pltpu.CompilerParams(dimension_semantics=("parallel",)),
    )(patches, w, b)


def fc_stack(x, w3, b3, w4, b4, w5, b5):
    """fc1+fc2+fc3 fused in one kernel; intermediates stay in registers/VMEM.

    x: (N, 400) bf16; w3: (400,128) bf16; w4, w5: (128,128) bf16; biases (1,128) f32.
    returns (N, 128) f32 padded logits.
    """
    N = x.shape[0]

    def kernel(x_ref, w3_ref, b3_ref, w4_ref, b4_ref, w5_ref, b5_ref, o_ref):
        h = jnp.dot(x_ref[...], w3_ref[...],
                    preferred_element_type=jnp.float32) + b3_ref[...]
        h = jnp.dot(h.astype(jnp.bfloat16), w4_ref[...],
                    preferred_element_type=jnp.float32) + b4_ref[...]
        o_ref[...] = jnp.dot(h.astype(jnp.bfloat16), w5_ref[...],
                             preferred_element_type=jnp.float32) + b5_ref[...]

    return pl.pallas_call(
        kernel,
        out_shape=jax.ShapeDtypeStruct((N, 128), jnp.float32),
        grid=(1,),
        in_specs=[
            pl.BlockSpec((N, 400), lambda i: (0, 0)),
            pl.BlockSpec((400, 128), lambda i: (0, 0)),
            pl.BlockSpec((1, 128), lambda i: (0, 0)),
            pl.BlockSpec((128, 128), lambda i: (0, 0)),
            pl.BlockSpec((1, 128), lambda i: (0, 0)),
            pl.BlockSpec((128, 128), lambda i: (0, 0)),
            pl.BlockSpec((1, 128), lambda i: (0, 0)),
        ],
        out_specs=pl.BlockSpec((N, 128), lambda i: (0, 0)),
    )(x, w3, b3, w4, b4, w5, b5)


# ---------------- plain-JAX glue (im2col, padding, weight prep) ----------------

def conv_patches_pooled(a, k):
    """im2col for a stride-1 'valid' conv on an already-padded NHWC input, with rows
    grouped by 2x2-pool corner so the kernel can pool via 4 contiguous-slab maxes.

    a: (N, Hp, Wp, C) f32.  Column order is (i, j, c) = kernel row, kernel col, channel.
    Returns (patches (N, 4*P8, k*k*C), (Hq, Wq), P8) where Hq=Ho//2, Wq=Wo//2 and
    P8 = Hq*Wq rounded up to a multiple of 8 (zero-padded patch rows).
    """
    N, Hp, Wp, C = a.shape
    Ho, Wo = Hp - k + 1, Wp - k + 1
    Hq, Wq = Ho // 2, Wo // 2
    P = Hq * Wq
    P8 = -(-P // 8) * 8
    K = k * k * C
    cols = []
    for i in range(k):
        for j in range(k):
            cols.append(a[:, i:i + Ho, j:j + Wo, :])       # (N, Ho, Wo, C)
    pat = jnp.concatenate(cols, axis=-1)                   # (N, Ho, Wo, K), cols (i,j,c)
    # rows -> (dy, dx, ph, pw): oh = 2*ph + dy, ow = 2*pw + dx
    pat = pat.reshape(N, Hq, 2, Wq, 2, K).transpose(0, 2, 4, 1, 3, 5)
    pat = pat.reshape(N, 4, P, K)
    if P8 != P:
        pat = jnp.pad(pat, ((0, 0), (0, 0), (0, P8 - P), (0, 0)))
    return pat.reshape(N, 4 * P8, K), (Hq, Wq), P8


def init_params(key):
    """Deterministic PyTorch-style init: uniform(-1/sqrt(fan_in), 1/sqrt(fan_in))."""
    keys = jax.random.split(key, 10)

    def u(k, shape, fan_in):
        bound = 1.0 / jnp.sqrt(jnp.float32(fan_in))
        return jax.random.uniform(k, shape, jnp.float32, -bound, bound)

    return {
        "w1": u(keys[0], (6, 1, 3, 3), 1 * 3 * 3),
        "b1": u(keys[1], (6,), 1 * 3 * 3),
        "w2": u(keys[2], (16, 6, 5, 5), 6 * 5 * 5),
        "b2": u(keys[3], (16,), 6 * 5 * 5),
        "w3": u(keys[4], (120, 400), 400),
        "b3": u(keys[5], (120,), 400),
        "w4": u(keys[6], (84, 120), 120),
        "b4": u(keys[7], (84,), 120),
        "w5": u(keys[8], (10, 84), 84),
        "b5": u(keys[9], (10,), 84),
    }


def preprocess_params(p):
    """One-time weight permutation (NHWC / (h,w,c) flatten order), 128-lane padding, bf16 cast."""
    bf16 = jnp.bfloat16

    def pad_cols(m, n=128):
        return jnp.pad(m, ((0, 0), (0, n - m.shape[1])))

    def pad_rc(m, rows, n=128):
        return jnp.pad(m, ((0, rows - m.shape[0]), (0, n - m.shape[1])))

    def pad_bias(b):
        return jnp.pad(b, (0, 128 - b.shape[0])).reshape(1, 128).astype(jnp.float32)

    # conv weights -> (K, 128) with K columns ordered (i, j, c)
    w1p = pad_cols(p["w1"].reshape(6, 9).T).astype(bf16)                       # (9, 128)
    w2p = pad_cols(p["w2"].transpose(2, 3, 1, 0).reshape(150, 16)).astype(bf16)  # (150, 128)
    # fc1: permute columns from torch (c,h,w) flatten to our (h,w,c) flatten
    w3p = pad_cols(
        p["w3"].reshape(120, 16, 5, 5).transpose(0, 2, 3, 1).reshape(120, 400).T
    ).astype(bf16)                                                             # (400, 128)
    w4p = pad_rc(p["w4"].T, 128).astype(bf16)                                  # (128, 128)
    w5p = pad_rc(p["w5"].T, 128).astype(bf16)                                  # (128, 128)

    return {
        "w1p": w1p, "b1p": pad_bias(p["b1"]),
        "w2p": w2p, "b2p": pad_bias(p["b2"]),
        "w3p": w3p, "b3p": pad_bias(p["b3"]),
        "w4p": w4p, "b4p": pad_bias(p["b4"]),
        "w5p": w5p, "b5p": pad_bias(p["b5"]),
    }


@jax.jit
def lenet_forward(params, x):
    """x: (N, 1, 28, 28) f32 NCHW (same as the PyTorch module). Returns (N, 10) f32."""
    N = x.shape[0]
    bf16 = jnp.bfloat16

    # conv1 (3x3, pad=1) + 2x2 max-pool, fused
    xp = jnp.pad(x[:, 0], ((0, 0), (1, 1), (1, 1)))[..., None]          # (N, 30, 30, 1) NHWC
    p1, (hq1, wq1), p8_1 = conv_patches_pooled(xp, 3)                   # (N, 800, 9)
    o1 = conv_pool(p1.astype(bf16), params["w1p"], params["b1p"], p8_1)  # (N, 200, 128)
    a1 = o1[:, :hq1 * wq1, :6].reshape(N, hq1, wq1, 6)                  # (N, 14, 14, 6) NHWC

    # conv2 (5x5, no pad) + 2x2 max-pool, fused
    p2, (hq2, wq2), p8_2 = conv_patches_pooled(a1, 5)                   # (N, 128, 150)
    o2 = conv_pool(p2.astype(bf16), params["w2p"], params["b2p"], p8_2)  # (N, 32, 128)

    # flatten in (h, w, c) order -- w3 columns were permuted at init to match
    fc_in = o2[:, :hq2 * wq2, :16].reshape(N, 400)                      # (N, 400)

    logits = fc_stack(fc_in.astype(bf16),
                      params["w3p"], params["b3p"],
                      params["w4p"], params["b4p"],
                      params["w5p"], params["b5p"])                     # (N, 128)
    return logits[:, :10]


if __name__ == "__main__":
    key = jax.random.PRNGKey(0)
    pkey, xkey = jax.random.split(key)
    params = preprocess_params(init_params(pkey))
    # Linear(400, 120) hard-wires the spatial size: input must be (N, 1, 28, 28).
    x = jax.random.normal(xkey, (2, 1, 28, 28), jnp.float32)
    out = lenet_forward(params, x)
    out = jax.block_until_ready(out)
    assert out.shape == (2, 10) and out.dtype == jnp.float32
    print("KERNEL_OK")
</pallas_src>

<mosaic_0001>
module attributes {stable_mosaic.version = 11 : i64} {
  func.func @kernel(%arg0: i32, %arg1: memref<1x800x9xbf16, #tpu.memory_space<vmem>>, %arg2: memref<9x128xbf16, #tpu.memory_space<vmem>>, %arg3: memref<1x128xf32, #tpu.memory_space<vmem>>, %arg4: memref<1x200x128xf32, #tpu.memory_space<vmem>>) attributes {dimension_semantics = [#tpu.dimension_semantics<parallel>], iteration_bounds = array<i64: 2>, scalar_prefetch = 0 : i64, scratch_operands = 0 : i64, tpu.core_type = #tpu.core_type<tc>, window_params = [{transform_indices = @transform_0, window_bounds = array<i64: 1, 800, 9>}, {pipeline_mode = #tpu.pipeline_mode<synchronous>, transform_indices = @transform_1, window_bounds = array<i64: 9, 128>}, {pipeline_mode = #tpu.pipeline_mode<synchronous>, transform_indices = @transform_2, window_bounds = array<i64: 1, 128>}, {transform_indices = @transform_3, window_bounds = array<i64: 1, 200, 128>}]} {
    %c0 = arith.constant 0 : index
    %c0_0 = arith.constant 0 : index
    %c0_1 = arith.constant 0 : index
    %0 = vector.load %arg1[%c0, %c0_0, %c0_1] : memref<1x800x9xbf16, #tpu.memory_space<vmem>>, vector<1x800x9xbf16>
    %1 = vector.shape_cast %0 : vector<1x800x9xbf16> to vector<800x9xbf16>
    %c0_2 = arith.constant 0 : index
    %c0_3 = arith.constant 0 : index
    %2 = vector.load %arg2[%c0_2, %c0_3] : memref<9x128xbf16, #tpu.memory_space<vmem>>, vector<9x128xbf16>
    %cst = arith.constant dense<0.000000e+00> : vector<800x128xf32>
    %3 = tpu.matmul %1, %2, %cst {dimension_numbers = #tpu.dot_dimension_numbers<[1], [0], [0], [1], [0, 0, 1, 1], [], []>} : vector<800x9xbf16>, vector<9x128xbf16>, vector<800x128xf32> -> vector<800x128xf32>
    %c0_4 = arith.constant 0 : index
    %c0_5 = arith.constant 0 : index
    %4 = vector.load %arg3[%c0_4, %c0_5] : memref<1x128xf32, #tpu.memory_space<vmem>>, vector<1x128xf32>
    %5 = vector.broadcast %4 : vector<1x128xf32> to vector<800x128xf32>
    %6 = arith.addf %3, %5 : vector<800x128xf32>
    %7 = vector.extract_strided_slice %6 {offsets = [0, 0], sizes = [200, 128], strides = [1, 1]} : vector<800x128xf32> to vector<200x128xf32>
    %8 = vector.extract_strided_slice %6 {offsets = [200, 0], sizes = [200, 128], strides = [1, 1]} : vector<800x128xf32> to vector<200x128xf32>
    %9 = arith.maximumf %7, %8 : vector<200x128xf32>
    %10 = vector.extract_strided_slice %6 {offsets = [400, 0], sizes = [200, 128], strides = [1, 1]} : vector<800x128xf32> to vector<200x128xf32>
    %11 = vector.extract_strided_slice %6 {offsets = [600, 0], sizes = [200, 128], strides = [1, 1]} : vector<800x128xf32> to vector<200x128xf32>
    %12 = arith.maximumf %10, %11 : vector<200x128xf32>
    %13 = arith.maximumf %9, %12 : vector<200x128xf32>
    %c0_6 = arith.constant 0 : index
    %c0_7 = arith.constant 0 : index
    %c0_8 = arith.constant 0 : index
    %14 = vector.load %arg4[%c0_6, %c0_7, %c0_8] : memref<1x200x128xf32, #tpu.memory_space<vmem>>, vector<1x200x128xf32>
    %15 = vector.shape_cast %14 : vector<1x200x128xf32> to vector<200x128xf32>
    %16 = vector.shape_cast %13 : vector<200x128xf32> to vector<1x200x128xf32>
    tpu.vector_store %arg4[%c0_6, %c0_7, %c0_8], %16 {strides = array<i32>} : memref<1x200x128xf32, #tpu.memory_space<vmem>>, vector<1x200x128xf32>,
    return
  }
  func.func @transform_0(%arg0: i32) -> (i32, i32, i32) {
    %c0_i32 = arith.constant 0 : i32
    %c0_i32_0 = arith.constant 0 : i32
    %c0_i32_1 = arith.constant 0 : i32
    return %arg0, %c0_i32, %c0_i32_0 : i32, i32, i32
  }
  func.func @transform_1(%arg0: i32) -> (i32, i32) {
    %c0_i32 = arith.constant 0 : i32
    %c0_i32_0 = arith.constant 0 : i32
    %c0_i32_1 = arith.constant 0 : i32
    return %c0_i32, %c0_i32_0 : i32, i32
  }
  func.func @transform_2(%arg0: i32) -> (i32, i32) {
    %c0_i32 = arith.constant 0 : i32
    %c0_i32_0 = arith.constant 0 : i32
    %c0_i32_1 = arith.constant 0 : i32
    return %c0_i32, %c0_i32_0 : i32, i32
  }
  func.func @transform_3(%arg0: i32) -> (i32, i32, i32) {
    %c0_i32 = arith.constant 0 : i32
    %c0_i32_0 = arith.constant 0 : i32
    %c0_i32_1 = arith.constant 0 : i32
    return %arg0, %c0_i32, %c0_i32_0 : i32, i32, i32
  }
}

module attributes {stable_mosaic.version = 11 : i64} {
  func.func @kernel(%arg0: i32, %arg1: memref<1x128x150xbf16, #tpu.memory_space<vmem>>, %arg2: memref<150x128xbf16, #tpu.memory_space<vmem>>, %arg3: memref<1x128xf32, #tpu.memory_space<vmem>>, %arg4: memref<1x32x128xf32, #tpu.memory_space<vmem>>) attributes {dimension_semantics = [#tpu.dimension_semantics<parallel>], iteration_bounds = array<i64: 2>, scalar_prefetch = 0 : i64, scratch_operands = 0 : i64, tpu.core_type = #tpu.core_type<tc>, window_params = [{transform_indices = @transform_0, window_bounds = array<i64: 1, 128, 150>}, {pipeline_mode = #tpu.pipeline_mode<synchronous>, transform_indices = @transform_1, window_bounds = array<i64: 150, 128>}, {pipeline_mode = #tpu.pipeline_mode<synchronous>, transform_indices = @transform_2, window_bounds = array<i64: 1, 128>}, {transform_indices = @transform_3, window_bounds = array<i64: 1, 32, 128>}]} {
    %c0 = arith.constant 0 : index
    %c0_0 = arith.constant 0 : index
    %c0_1 = arith.constant 0 : index
    %0 = vector.load %arg1[%c0, %c0_0, %c0_1] : memref<1x128x150xbf16, #tpu.memory_space<vmem>>, vector<1x128x150xbf16>
    %1 = vector.shape_cast %0 : vector<1x128x150xbf16> to vector<128x150xbf16>
    %c0_2 = arith.constant 0 : index
    %c0_3 = arith.constant 0 : index
    %2 = vector.load %arg2[%c0_2, %c0_3] : memref<150x128xbf16, #tpu.memory_space<vmem>>, vector<150x128xbf16>
    %cst = arith.constant dense<0.000000e+00> : vector<128x128xf32>
    %3 = tpu.matmul %1, %2, %cst {dimension_numbers = #tpu.dot_dimension_numbers<[1], [0], [0], [1], [0, 0, 1, 1], [], []>} : vector<128x150xbf16>, vector<150x128xbf16>, vector<128x128xf32> -> vector<128x128xf32>
    %c0_4 = arith.constant 0 : index
    %c0_5 = arith.constant 0 : index
    %4 = vector.load %arg3[%c0_4, %c0_5] : memref<1x128xf32, #tpu.memory_space<vmem>>, vector<1x128xf32>
    %5 = vector.broadcast %4 : vector<1x128xf32> to vector<128x128xf32>
    %6 = arith.addf %3, %5 : vector<128x128xf32>
    %7 = vector.extract_strided_slice %6 {offsets = [0, 0], sizes = [32, 128], strides = [1, 1]} : vector<128x128xf32> to vector<32x128xf32>
    %8 = vector.extract_strided_slice %6 {offsets = [32, 0], sizes = [32, 128], strides = [1, 1]} : vector<128x128xf32> to vector<32x128xf32>
    %9 = arith.maximumf %7, %8 : vector<32x128xf32>
    %10 = vector.extract_strided_slice %6 {offsets = [64, 0], sizes = [32, 128], strides = [1, 1]} : vector<128x128xf32> to vector<32x128xf32>
    %11 = vector.extract_strided_slice %6 {offsets = [96, 0], sizes = [32, 128], strides = [1, 1]} : vector<128x128xf32> to vector<32x128xf32>
    %12 = arith.maximumf %10, %11 : vector<32x128xf32>
    %13 = arith.maximumf %9, %12 : vector<32x128xf32>
    %c0_6 = arith.constant 0 : index
    %c0_7 = arith.constant 0 : index
    %c0_8 = arith.constant 0 : index
    %14 = vector.load %arg4[%c0_6, %c0_7, %c0_8] : memref<1x32x128xf32, #tpu.memory_space<vmem>>, vector<1x32x128xf32>
    %15 = vector.shape_cast %14 : vector<1x32x128xf32> to vector<32x128xf32>
    %16 = vector.shape_cast %13 : vector<32x128xf32> to vector<1x32x128xf32>
    tpu.vector_store %arg4[%c0_6, %c0_7, %c0_8], %16 {strides = array<i32>} : memref<1x32x128xf32, #tpu.memory_space<vmem>>, vector<1x32x128xf32>,
    return
  }
  func.func @transform_0(%arg0: i32) -> (i32, i32, i32) {
    %c0_i32 = arith.constant 0 : i32
    %c0_i32_0 = arith.constant 0 : i32
    %c0_i32_1 = arith.constant 0 : i32
    return %arg0, %c0_i32, %c0_i32_0 : i32, i32, i32
  }
  func.func @transform_1(%arg0: i32) -> (i32, i32) {
    %c0_i32 = arith.constant 0 : i32
    %c0_i32_0 = arith.constant 0 : i32
    %c0_i32_1 = arith.constant 0 : i32
    return %c0_i32, %c0_i32_0 : i32, i32
  }
  func.func @transform_2(%arg0: i32) -> (i32, i32) {
    %c0_i32 = arith.constant 0 : i32
    %c0_i32_0 = arith.constant 0 : i32
    %c0_i32_1 = arith.constant 0 : i32
    return %c0_i32, %c0_i32_0 : i32, i32
  }
  func.func @transform_3(%arg0: i32) -> (i32, i32, i32) {
    %c0_i32 = arith.constant 0 : i32
    %c0_i32_0 = arith.constant 0 : i32
    %c0_i32_1 = arith.constant 0 : i32
    return %arg0, %c0_i32, %c0_i32_0 : i32, i32, i32
  }
}

module attributes {stable_mosaic.version = 11 : i64} {
  func.func @kernel(%arg0: i32, %arg1: memref<2x400xbf16, #tpu.memory_space<vmem>>, %arg2: memref<400x128xbf16, #tpu.memory_space<vmem>>, %arg3: memref<1x128xf32, #tpu.memory_space<vmem>>, %arg4: memref<128x128xbf16, #tpu.memory_space<vmem>>, %arg5: memref<1x128xf32, #tpu.memory_space<vmem>>, %arg6: memref<128x128xbf16, #tpu.memory_space<vmem>>, %arg7: memref<1x128xf32, #tpu.memory_space<vmem>>, %arg8: memref<2x128xf32, #tpu.memory_space<vmem>>) attributes {dimension_semantics = [#tpu.dimension_semantics<arbitrary>], iteration_bounds = array<i64: 1>, scalar_prefetch = 0 : i64, scratch_operands = 0 : i64, tpu.core_type = #tpu.core_type<tc>, window_params = [{pipeline_mode = #tpu.pipeline_mode<synchronous>, transform_indices = @transform_0, window_bounds = array<i64: 2, 400>}, {pipeline_mode = #tpu.pipeline_mode<synchronous>, transform_indices = @transform_1, window_bounds = array<i64: 400, 128>}, {pipeline_mode = #tpu.pipeline_mode<synchronous>, transform_indices = @transform_2, window_bounds = array<i64: 1, 128>}, {pipeline_mode = #tpu.pipeline_mode<synchronous>, transform_indices = @transform_3, window_bounds = array<i64: 128, 128>}, {pipeline_mode = #tpu.pipeline_mode<synchronous>, transform_indices = @transform_4, window_bounds = array<i64: 1, 128>}, {pipeline_mode = #tpu.pipeline_mode<synchronous>, transform_indices = @transform_5, window_bounds = array<i64: 128, 128>}, {pipeline_mode = #tpu.pipeline_mode<synchronous>, transform_indices = @transform_6, window_bounds = array<i64: 1, 128>}, {pipeline_mode = #tpu.pipeline_mode<synchronous>, transform_indices = @transform_7, window_bounds = array<i64: 2, 128>}]} {
    %c0 = arith.constant 0 : index
    %c0_0 = arith.constant 0 : index
    %0 = vector.load %arg1[%c0, %c0_0] : memref<2x400xbf16, #tpu.memory_space<vmem>>, vector<2x400xbf16>
    %c0_1 = arith.constant 0 : index
    %c0_2 = arith.constant 0 : index
    %1 = vector.load %arg2[%c0_1, %c0_2] : memref<400x128xbf16, #tpu.memory_space<vmem>>, vector<400x128xbf16>
    %cst = arith.constant dense<0.000000e+00> : vector<2x128xf32>
    %2 = tpu.matmul %0, %1, %cst {dimension_numbers = #tpu.dot_dimension_numbers<[1], [0], [0], [1], [0, 0, 1, 1], [], []>} : vector<2x400xbf16>, vector<400x128xbf16>, vector<2x128xf32> -> vector<2x128xf32>
    %c0_3 = arith.constant 0 : index
    %c0_4 = arith.constant 0 : index
    %3 = vector.load %arg3[%c0_3, %c0_4] : memref<1x128xf32, #tpu.memory_space<vmem>>, vector<1x128xf32>
    %4 = vector.broadcast %3 : vector<1x128xf32> to vector<2x128xf32>
    %5 = arith.addf %2, %4 : vector<2x128xf32>
    %6 = arith.truncf %5 : vector<2x128xf32> to vector<2x128xbf16>
    %c0_5 = arith.constant 0 : index
    %c0_6 = arith.constant 0 : index
    %7 = vector.load %arg4[%c0_5, %c0_6] : memref<128x128xbf16, #tpu.memory_space<vmem>>, vector<128x128xbf16>
    %cst_7 = arith.constant dense<0.000000e+00> : vector<2x128xf32>
    %8 = tpu.matmul %6, %7, %cst_7 {dimension_numbers = #tpu.dot_dimension_numbers<[1], [0], [0], [1], [0, 0, 1, 1], [], []>} : vector<2x128xbf16>, vector<128x128xbf16>, vector<2x128xf32> -> vector<2x128xf32>
    %c0_8 = arith.constant 0 : index
    %c0_9 = arith.constant 0 : index
    %9 = vector.load %arg5[%c0_8, %c0_9] : memref<1x128xf32, #tpu.memory_space<vmem>>, vector<1x128xf32>
    %10 = vector.broadcast %9 : vector<1x128xf32> to vector<2x128xf32>
    %11 = arith.addf %8, %10 : vector<2x128xf32>
    %12 = arith.truncf %11 : vector<2x128xf32> to vector<2x128xbf16>
    %c0_10 = arith.constant 0 : index
    %c0_11 = arith.constant 0 : index
    %13 = vector.load %arg6[%c0_10, %c0_11] : memref<128x128xbf16, #tpu.memory_space<vmem>>, vector<128x128xbf16>
    %cst_12 = arith.constant dense<0.000000e+00> : vector<2x128xf32>
    %14 = tpu.matmul %12, %13, %cst_12 {dimension_numbers = #tpu.dot_dimension_numbers<[1], [0], [0], [1], [0, 0, 1, 1], [], []>} : vector<2x128xbf16>, vector<128x128xbf16>, vector<2x128xf32> -> vector<2x128xf32>
    %c0_13 = arith.constant 0 : index
    %c0_14 = arith.constant 0 : index
    %15 = vector.load %arg7[%c0_13, %c0_14] : memref<1x128xf32, #tpu.memory_space<vmem>>, vector<1x128xf32>
    %16 = vector.broadcast %15 : vector<1x128xf32> to vector<2x128xf32>
    %17 = arith.addf %14, %16 : vector<2x128xf32>
    %c0_15 = arith.constant 0 : index
    %c0_16 = arith.constant 0 : index
    %18 = vector.load %arg8[%c0_15, %c0_16] : memref<2x128xf32, #tpu.memory_space<vmem>>, vector<2x128xf32>
    tpu.vector_store %arg8[%c0_15, %c0_16], %17 {strides = array<i32>} : memref<2x128xf32, #tpu.memory_space<vmem>>, vector<2x128xf32>,
    return
  }
  func.func @transform_0(%arg0: i32) -> (i32, i32) {
    %c0_i32 = arith.constant 0 : i32
    %c0_i32_0 = arith.constant 0 : i32
    %c0_i32_1 = arith.constant 0 : i32
    return %c0_i32, %c0_i32_0 : i32, i32
  }
  func.func @transform_1(%arg0: i32) -> (i32, i32) {
    %c0_i32 = arith.constant 0 : i32
    %c0_i32_0 = arith.constant 0 : i32
    %c0_i32_1 = arith.constant 0 : i32
    return %c0_i32, %c0_i32_0 : i32, i32
  }
  func.func @transform_2(%arg0: i32) -> (i32, i32) {
    %c0_i32 = arith.constant 0 : i32
    %c0_i32_0 = arith.constant 0 : i32
    %c0_i32_1 = arith.constant 0 : i32
    return %c0_i32, %c0_i32_0 : i32, i32
  }
  func.func @transform_3(%arg0: i32) -> (i32, i32) {
    %c0_i32 = arith.constant 0 : i32
    %c0_i32_0 = arith.constant 0 : i32
    %c0_i32_1 = arith.constant 0 : i32
    return %c0_i32, %c0_i32_0 : i32, i32
  }
  func.func @transform_4(%arg0: i32) -> (i32, i32) {
    %c0_i32 = arith.constant 0 : i32
    %c0_i32_0 = arith.constant 0 : i32
    %c0_i32_1 = arith.constant 0 : i32
    return %c0_i32, %c0_i32_0 : i32, i32
  }
  func.func @transform_5(%arg0: i32) -> (i32, i32) {
    %c0_i32 = arith.constant 0 : i32
    %c0_i32_0 = arith.constant 0 : i32
    %c0_i32_1 = arith.constant 0 : i32
    return %c0_i32, %c0_i32_0 : i32, i32
  }
  func.func @transform_6(%arg0: i32) -> (i32, i32) {
    %c0_i32 = arith.constant 0 : i32
    %c0_i32_0 = arith.constant 0 : i32
    %c0_i32_1 = arith.constant 0 : i32
    return %c0_i32, %c0_i32_0 : i32, i32
  }
  func.func @transform_7(%arg0: i32) -> (i32, i32) {
    %c0_i32 = arith.constant 0 : i32
    %c0_i32_0 = arith.constant 0 : i32
    %c0_i32_1 = arith.constant 0 : i32
    return %c0_i32, %c0_i32_0 : i32, i32
  }
}

</mosaic_0001>

<llo_original>
// kernel: lenet_forward.3
$region0: #{lenet_forward.3}
  #allocation0 [shape = 'u32[]', space=smem, size = 0x4, offset = 0x4, fixed_abs, tag = 'smem constant byte address 0x4 - core index']
  #allocation1 [shape = 'u32[72,128]{1,0:T(1,128)}', space=vmem, size = 0x9000, scoped, tag = 'internal scratch']
  %s0 = inlined_call_operand.vmem [shape: bf16[2,800,9], index: 0, kind: input, shape index: {}]
  %s1 = inlined_call_operand.vmem [shape: bf16[9,128], index: 1, kind: input, shape index: {}]
  %s2 = inlined_call_operand.vmem [shape: f32[1,128], index: 2, kind: input, shape index: {}]
  %s3 = inlined_call_operand.vmem [shape: f32[2,200,128], index: 3, kind: output, shape index: {}]
  %s4 = sld [smem:[#allocation0]]
  $region45: #{lenet_forward.3} parent=0
    _
  %s6 = ssub.s32 1, %s4
  %s7 = scalar_select 0, %s6, %s4
  loop: start=0, step=1, limit=4
  $region2: #{lenet_forward.3} parent=0 // loop_pre_header
    _
  $region3: #{lenet_forward.3} parent=0 // loop_header
    %s9 = sphi 0, %s13
    %p10 = scmp.ge.s32.totalorder %s9, 4
    %s19 = sphi 0, %s21
    %s22 = sphi 0, %s19
    %s23 = sphi 0, %s22
    %s39 = sphi 0, %s23
    %s43 = sphi 0, %s43
    %s45 = sphi 0, %s43
    %s46 = sphi 0, %s45
    %s60 = sphi 0, %s46
    %s64 = sphi 0, %s64
    %s66 = sphi 0, %s64
    %s67 = sphi 0, %s66
    %s81 = sphi 0, %s67
    %s87 = sphi 0, %s89
    %s90 = sphi 0, %s87
    %s91 = sphi 0, %s90
    %s107 = sphi 0, %s91
  $region4: #{lenet_forward.3} parent=0 // loop_header_branch
    %12 = sbr.rel (%p10) target = $region8
  $region5: #{lenet_forward.3} parent=0 // loop_body
    %s14 = ssub.s32 %s9, 1
    %s15 = ssub.s32 %s9, 2
    %s16 = sadd.s32 %s9, 1
    %s17 = ssub.s32 %s9, %s16
    %p18 = scmp.eq.s32.totalorder %s17, 0
    %s20 = sadd.s32 %s19, 1
    %s21 = scalar_select %p18, %s19, %s20
    %p24 = pneg %p18
    %p25 = scmp.eq.s32.totalorder %s9, 1
    %p26 = por %p24, %p25
    %p27 = scmp.ne.s32.totalorder %s19, %s22
    %p28 = scmp.eq.s32.totalorder %s9, 0
    %p29 = por %p27, %p28
    %p30 = scmp.ne.s32.totalorder %s19, %s22
    %p31 = scmp.eq.s32.totalorder %s14, 1
    %p32 = por %p30, %p31
    %p33 = scmp.ne.s32.totalorder %s22, %s23
    %p34 = scmp.eq.s32.totalorder %s14, 0
    %p35 = por %p33, %p34
    %p36 = scmp.ne.s32.totalorder %s22, %s23
    %p37 = scmp.eq.s32.totalorder %s15, 1
    %p38 = por %p36, %p37
    %p40 = scmp.ne.s32.totalorder %s23, %s39
    %p41 = scmp.eq.s32.totalorder %s15, 0
    %p42 = por %p40, %p41
    %s44 = sadd.s32 %s43, 1
    %p47 = scmp.eq.s32.totalorder %s9, 1
    %p48 = scmp.ne.s32.totalorder %s43, %s45
    %p49 = scmp.eq.s32.totalorder %s9, 0
    %p50 = por %p48, %p49
    %p51 = scmp.ne.s32.totalorder %s43, %s45
    %p52 = scmp.eq.s32.totalorder %s14, 1
    %p53 = por %p51, %p52
    %p54 = scmp.ne.s32.totalorder %s45, %s46
    %p55 = scmp.eq.s32.totalorder %s14, 0
    %p56 = por %p54, %p55
    %p57 = scmp.ne.s32.totalorder %s45, %s46
    %p58 = scmp.eq.s32.totalorder %s15, 1
    %p59 = por %p57, %p58
    %p61 = scmp.ne.s32.totalorder %s46, %s60
    %p62 = scmp.eq.s32.totalorder %s15, 0
    %p63 = por %p61, %p62
    %s65 = sadd.s32 %s64, 1
    %p68 = scmp.eq.s32.totalorder %s9, 1
    %p69 = scmp.ne.s32.totalorder %s64, %s66
    %p70 = scmp.eq.s32.totalorder %s9, 0
    %p71 = por %p69, %p70
    %p72 = scmp.ne.s32.totalorder %s64, %s66
    %p73 = scmp.eq.s32.totalorder %s14, 1
    %p74 = por %p72, %p73
    %p75 = scmp.ne.s32.totalorder %s66, %s67
    %p76 = scmp.eq.s32.totalorder %s14, 0
    %p77 = por %p75, %p76
    %p78 = scmp.ne.s32.totalorder %s66, %s67
    %p79 = scmp.eq.s32.totalorder %s15, 1
    %p80 = por %p78, %p79
    %p82 = scmp.ne.s32.totalorder %s67, %s81
    %p83 = scmp.eq.s32.totalorder %s15, 0
    %p84 = por %p82, %p83
    %s85 = ssub.s32 %s9, %s16
    %p86 = scmp.eq.s32.totalorder %s85, 0
    %s88 = sadd.s32 %s87, 1
    %s89 = scalar_select %p86, %s87, %s88
    %p92 = pneg %p86
    %p93 = scmp.eq.s32.totalorder %s9, 1
    %p94 = por %p92, %p93
    %p95 = scmp.ne.s32.totalorder %s87, %s90
    %p96 = scmp.eq.s32.totalorder %s9, 0
    %p97 = por %p95, %p96
    %p98 = scmp.ne.s32.totalorder %s87, %s90
    %p99 = scmp.eq.s32.totalorder %s14, 1
    %p100 = por %p98, %p99
    %p101 = scmp.ne.s32.totalorder %s90, %s91
    %p102 = scmp.eq.s32.totalorder %s14, 0
    %p103 = por %p101, %p102
    %p104 = scmp.ne.s32.totalorder %s90, %s91
    %p105 = scmp.eq.s32.totalorder %s15, 1
    %p106 = por %p104, %p105
    %p108 = scmp.ne.s32.totalorder %s91, %s107
    %p109 = scmp.eq.s32.totalorder %s15, 0
    %p110 = por %p108, %p109
    %p111 = scmp.le.s32.totalorder 1, %s9
    %p112 = scmp.lt.s32.totalorder %s9, 3
    %p113 = pnand %p111, %p112
    %p114 = pneg %p113
    // Predicated region
    $region9: #{lenet_forward.3} parent=5 // pred_check
      _
    $region10: #{lenet_forward.3} parent=5 // pred_check_branch
      %116 = sbr.rel (%p113) target = $region12
    $region11: #{lenet_forward.3} parent=5 // pred_region
      %s117 = ssub.s32 %s9, 1
      // Predicated region
      $region13: #{lenet_forward.3} parent=11 // pred_check
        %p118 = pneg %p56
      $region14: #{lenet_forward.3} parent=11 // pred_check_branch
        %120 = sbr.rel (%p118) target = $region16
      $region15: #{lenet_forward.3} parent=11 // pred_region
        _
      $region16: #{lenet_forward.3} parent=11 // pred_fallthru
        _
      // Predicated region
      $region17: #{lenet_forward.3} parent=11 // pred_check
        %p121 = pneg %p77
      $region18: #{lenet_forward.3} parent=11 // pred_check_branch
        %123 = sbr.rel (%p121) target = $region20
      $region19: #{lenet_forward.3} parent=11 // pred_region
        _
      $region20: #{lenet_forward.3} parent=11 // pred_fallthru
        _
    $region12: #{lenet_forward.3} parent=5 // pred_fallthru
      _
    %p124 = scmp.lt.s32.totalorder %s9, 2
    // Predicated region
    $region21: #{lenet_forward.3} parent=5 // pred_check
      %p125 = pneg %p124
    $region22: #{lenet_forward.3} parent=5 // pred_check_branch
      %127 = sbr.rel (%p125) target = $region24
    $region23: #{lenet_forward.3} parent=5 // pred_region
      // Predicated region
      $region25: #{lenet_forward.3} parent=23 // pred_check
        %p128 = pneg %p29
      $region26: #{lenet_forward.3} parent=23 // pred_check_branch
        %130 = sbr.rel (%p128) target = $region28
      $region27: #{lenet_forward.3} parent=23 // pred_region
        %p131 = scmp.lt.s32.totalorder %s9, 1
        %s132 = scalar_select %p131, %s9, 1
        %s133 = smul.addr %s132, 100
        %s134 = smul.addr %s133, 4
        %s135 = scalar_lea.vmem %s0, %s134
      $region28: #{lenet_forward.3} parent=23 // pred_fallthru
        _
    $region24: #{lenet_forward.3} parent=5 // pred_fallthru
      _
    %p136 = scmp.le.s32.totalorder 1, %s9
    %p137 = scmp.lt.s32.totalorder %s9, 3
    %p138 = pnand %p136, %p137
    %p139 = pneg %p138
    // Predicated region
    $region29: #{lenet_forward.3} parent=5 // pred_check
      _
    $region30: #{lenet_forward.3} parent=5 // pred_check_branch
      %141 = sbr.rel (%p138) target = $region32
    $region31: #{lenet_forward.3} parent=5 // pred_region
      %s142 = ssub.s32 %s9, 1
      %p143 = scmp.lt.s32.totalorder %s14, 1
      %s144 = scalar_select %p143, %s14, 1
      %s145 = smul.addr %s144, 100
      %s146 = smul.addr %s145, 4
      %s147 = scalar_lea.vmem %s0, %s146
      %p148 = pneg %p35
      %p149 = pneg %p32
      %p150 = pneg %p56
      %p151 = pneg %p53
      %p152 = pneg %p77
      %p153 = pneg %p74
      %p154 = pneg %p103
      %p155 = pneg %p100
      %p156 = scmp.lt.s32.totalorder %s14, 1
      %s157 = scalar_select %p156, %s14, 1
      %s158 = smul.addr %s157, 25
      %s159 = smul.addr %s158, 8
      %s160 = scalar_lea.vmem %s3, %s159
      %p161 = scmp.lt.s32.totalorder %s14, 1
      %s162 = scalar_select %p161, %s14, 1
      %s163 = smul.addr %s162, 100
      %s164 = smul.addr %s163, 4
      %s165 = scalar_lea.vmem %s0, %s164
      %p166 = scmp.lt.s32.totalorder %s14, 1
      %s167 = scalar_select %p166, %s14, 1
      %s168 = smul.addr %s167, 25
      %s169 = smul.addr %s168, 8
      %s170 = scalar_lea.vmem %s3, %s169
      %v172 = vld [vmem:[%s165] sm:$0xf]
      %v173 = vld [vmem:[%s165 + $0x4] sm:$0xf]
      %v174 = vld [vmem:[%s165 + $0x8] sm:$0xf]
      %v175 = vld [vmem:[%s165 + $0xc] sm:$0xf]
      %v176 = vld [vmem:[%s165 + $0x10] sm:$0xf]
      %v177 = vld [vmem:[%s165 + $0x14] sm:$0xf]
      %v178 = vld [vmem:[%s165 + $0x18] sm:$0xf]
      %v179 = vld [vmem:[%s165 + $0x1c] sm:$0xf]
      %v180 = vld [vmem:[%s165 + $0x20] sm:$0xf]
      %v181 = vld [vmem:[%s165 + $0x24] sm:$0xf]
      %v182 = vld [vmem:[%s165 + $0x28] sm:$0xf]
      %v183 = vld [vmem:[%s165 + $0x2c] sm:$0xf]
      %v184 = vld [vmem:[%s165 + $0x30] sm:$0xf]
      %v185 = vld [vmem:[%s165 + $0x34] sm:$0xf]
      %v186 = vld [vmem:[%s165 + $0x38] sm:$0xf]
      %v187 = vld [vmem:[%s165 + $0x3c] sm:$0xf]
      %v188 = vld [vmem:[%s165 + $0x40] sm:$0xf]
      %v189 = vld [vmem:[%s165 + $0x44] sm:$0xf]
      %v190 = vld [vmem:[%s165 + $0x48] sm:$0xf]
      %v191 = vld [vmem:[%s165 + $0x4c] sm:$0xf]
      %v192 = vld [vmem:[%s165 + $0x50] sm:$0xf]
      %v193 = vld [vmem:[%s165 + $0x54] sm:$0xf]
      %v194 = vld [vmem:[%s165 + $0x58] sm:$0xf]
      %v195 = vld [vmem:[%s165 + $0x5c] sm:$0xf]
      %v196 = vld [vmem:[%s165 + $0x60] sm:$0xf]
      %v197 = vld [vmem:[%s165 + $0x64] sm:$0xf]
      %v198 = vld [vmem:[%s165 + $0x68] sm:$0xf]
      %v199 = vld [vmem:[%s165 + $0x6c] sm:$0xf]
      %v200 = vld [vmem:[%s165 + $0x70] sm:$0xf]
      %v201 = vld [vmem:[%s165 + $0x74] sm:$0xf]
      %v202 = vld [vmem:[%s165 + $0x78] sm:$0xf]
      %v203 = vld [vmem:[%s165 + $0x7c] sm:$0xf]
      %v204 = vld [vmem:[%s165 + $0x80] sm:$0xf]
      %v205 = vld [vmem:[%s165 + $0x84] sm:$0xf]
      %v206 = vld [vmem:[%s165 + $0x88] sm:$0xf]
      %v207 = vld [vmem:[%s165 + $0x8c] sm:$0xf]
      %v208 = vld [vmem:[%s165 + $0x90] sm:$0xf]
      %v209 = vld [vmem:[%s165 + $0x94] sm:$0xf]
      %v210 = vld [vmem:[%s165 + $0x98] sm:$0xf]
      %v211 = vld [vmem:[%s165 + $0x9c] sm:$0xf]
      %v212 = vld [vmem:[%s165 + $0xa0] sm:$0xf]
      %v213 = vld [vmem:[%s165 + $0xa4] sm:$0xf]
      %v214 = vld [vmem:[%s165 + $0xa8] sm:$0xf]
      %v215 = vld [vmem:[%s165 + $0xac] sm:$0xf]
      %v216 = vld [vmem:[%s165 + $0xb0] sm:$0xf]
      %v217 = vld [vmem:[%s165 + $0xb4] sm:$0xf]
      %v218 = vld [vmem:[%s165 + $0xb8] sm:$0xf]
      %v219 = vld [vmem:[%s165 + $0xbc] sm:$0xf]
      %v220 = vld [vmem:[%s165 + $0xc0] sm:$0xf]
      %v221 = vld [vmem:[%s165 + $0xc4] sm:$0xf]
      %v222 = vld [vmem:[%s165 + $0xc8] sm:$0xf]
      %v223 = vld [vmem:[%s165 + $0xcc] sm:$0xf]
      %v224 = vld [vmem:[%s165 + $0xd0] sm:$0xf]
      %v225 = vld [vmem:[%s165 + $0xd4] sm:$0xf]
      %v226 = vld [vmem:[%s165 + $0xd8] sm:$0xf]
      %v227 = vld [vmem:[%s165 + $0xdc] sm:$0xf]
      %v228 = vld [vmem:[%s165 + $0xe0] sm:$0xf]
      %v229 = vld [vmem:[%s165 + $0xe4] sm:$0xf]
      %v230 = vld [vmem:[%s165 + $0xe8] sm:$0xf]
      %v231 = vld [vmem:[%s165 + $0xec] sm:$0xf]
      %v232 = vld [vmem:[%s165 + $0xf0] sm:$0xf]
      %v233 = vld [vmem:[%s165 + $0xf4] sm:$0xf]
      %v234 = vld [vmem:[%s165 + $0xf8] sm:$0xf]
      %v235 = vld [vmem:[%s165 + $0xfc] sm:$0xf]
      %v236 = vld [vmem:[%s165 + $0x100] sm:$0xf]
      %v237 = vld [vmem:[%s165 + $0x104] sm:$0xf]
      %v238 = vld [vmem:[%s165 + $0x108] sm:$0xf]
      %v239 = vld [vmem:[%s165 + $0x10c] sm:$0xf]
      %v240 = vld [vmem:[%s165 + $0x110] sm:$0xf]
      %v241 = vld [vmem:[%s165 + $0x114] sm:$0xf]
      %v242 = vld [vmem:[%s165 + $0x118] sm:$0xf]
      %v243 = vld [vmem:[%s165 + $0x11c] sm:$0xf]
      %v244 = vld [vmem:[%s165 + $0x120] sm:$0xf]
      %v245 = vld [vmem:[%s165 + $0x124] sm:$0xf]
      %v246 = vld [vmem:[%s165 + $0x128] sm:$0xf]
      %v247 = vld [vmem:[%s165 + $0x12c] sm:$0xf]
      %v248 = vld [vmem:[%s165 + $0x130] sm:$0xf]
      %v249 = vld [vmem:[%s165 + $0x134] sm:$0xf]
      %v250 = vld [vmem:[%s165 + $0x138] sm:$0xf]
      %v251 = vld [vmem:[%s165 + $0x13c] sm:$0xf]
      %v252 = vld [vmem:[%s165 + $0x140] sm:$0xf]
      %v253 = vld [vmem:[%s165 + $0x144] sm:$0xf]
      %v254 = vld [vmem:[%s165 + $0x148] sm:$0xf]
      %v255 = vld [vmem:[%s165 + $0x14c] sm:$0xf]
      %v256 = vld [vmem:[%s165 + $0x150] sm:$0xf]
      %v257 = vld [vmem:[%s165 + $0x154] sm:$0xf]
      %v258 = vld [vmem:[%s165 + $0x158] sm:$0xf]
      %v259 = vld [vmem:[%s165 + $0x15c] sm:$0xf]
      %v260 = vld [vmem:[%s165 + $0x160] sm:$0xf]
      %v261 = vld [vmem:[%s165 + $0x164] sm:$0xf]
      %v262 = vld [vmem:[%s165 + $0x168] sm:$0xf]
      %v263 = vld [vmem:[%s165 + $0x16c] sm:$0xf]
      %v264 = vld [vmem:[%s165 + $0x170] sm:$0xf]
      %v265 = vld [vmem:[%s165 + $0x174] sm:$0xf]
      %v266 = vld [vmem:[%s165 + $0x178] sm:$0xf]
      %v267 = vld [vmem:[%s165 + $0x17c] sm:$0xf]
      %v268 = vld [vmem:[%s165 + $0x180] sm:$0xf]
      %v269 = vld [vmem:[%s165 + $0x184] sm:$0xf]
      %v270 = vld [vmem:[%s165 + $0x188] sm:$0xf]
      %v271 = vld [vmem:[%s165 + $0x18c] sm:$0xf]
      %v272 = vld [vmem:[%s1] sm:$0xf]
      %v273 = vld [vmem:[%s1 + $0x4] sm:$0x1]
      %v274 = vld [vmem:[%s2] sm:$0x1]
      %v276 = vperm.slane %v274, 0
      %v378 = vunpack.c.l.b16 %v172
      %v379 = vunpack.c.l.b16 %v173
      %v380 = vunpack.c.l.b16 %v174
      %v381 = vunpack.c.l.b16 %v175
      %v382 = vunpack.c.l.b16 %v176
      %v383 = vunpack.c.l.b16 %v177
      %v384 = vunpack.c.l.b16 %v178
      %v385 = vunpack.c.l.b16 %v179
      %v386 = vunpack.c.l.b16 %v180
      %v387 = vunpack.c.l.b16 %v181
      %v388 = vunpack.c.l.b16 %v182
      %v389 = vunpack.c.l.b16 %v183
      %v390 = vunpack.c.l.b16 %v184
      %v391 = vunpack.c.l.b16 %v185
      %v392 = vunpack.c.l.b16 %v186
      %v393 = vunpack.c.l.b16 %v187
      %v394 = vunpack.c.l.b16 %v188
      %v395 = vunpack.c.l.b16 %v189
      %v396 = vunpack.c.l.b16 %v190
      %v397 = vunpack.c.l.b16 %v191
      %v398 = vunpack.c.l.b16 %v192
      %v399 = vunpack.c.l.b16 %v193
      %v400 = vunpack.c.l.b16 %v194
      %v401 = vunpack.c.l.b16 %v195
      %v402 = vunpack.c.l.b16 %v196
      %v403 = vunpack.c.l.b16 %v197
      %v404 = vunpack.c.l.b16 %v198
      %v405 = vunpack.c.l.b16 %v199
      %v406 = vunpack.c.l.b16 %v200
      %v407 = vunpack.c.l.b16 %v201
      %v408 = vunpack.c.l.b16 %v202
      %v409 = vunpack.c.l.b16 %v203
      %v410 = vunpack.c.l.b16 %v204
      %v411 = vunpack.c.l.b16 %v205
      %v412 = vunpack.c.l.b16 %v206
      %v413 = vunpack.c.l.b16 %v207
      %v414 = vunpack.c.l.b16 %v208
      %v415 = vunpack.c.l.b16 %v209
      %v416 = vunpack.c.l.b16 %v210
      %v417 = vunpack.c.l.b16 %v211
      %v418 = vunpack.c.l.b16 %v212
      %v419 = vunpack.c.l.b16 %v213
      %v420 = vunpack.c.l.b16 %v214
      %v421 = vunpack.c.l.b16 %v215
      %v422 = vunpack.c.l.b16 %v216
      %v423 = vunpack.c.l.b16 %v217
      %v424 = vunpack.c.l.b16 %v218
      %v425 = vunpack.c.l.b16 %v219
      %v426 = vunpack.c.l.b16 %v220
      %v427 = vunpack.c.l.b16 %v221
      %v428 = vunpack.c.l.b16 %v222
      %v429 = vunpack.c.l.b16 %v223
      %v430 = vunpack.c.l.b16 %v224
      %v431 = vunpack.c.l.b16 %v225
      %v432 = vunpack.c.l.b16 %v226
      %v433 = vunpack.c.l.b16 %v227
      %v434 = vunpack.c.l.b16 %v228
      %v435 = vunpack.c.l.b16 %v229
      %v436 = vunpack.c.l.b16 %v230
      %v437 = vunpack.c.l.b16 %v231
      %v438 = vunpack.c.l.b16 %v232
      %v439 = vunpack.c.l.b16 %v233
      %v440 = vunpack.c.l.b16 %v234
      %v441 = vunpack.c.l.b16 %v235
      %v442 = vunpack.c.l.b16 %v236
      %v443 = vunpack.c.l.b16 %v237
      %v444 = vunpack.c.l.b16 %v238
      %v445 = vunpack.c.l.b16 %v239
      %v446 = vunpack.c.l.b16 %v240
      %v447 = vunpack.c.l.b16 %v241
      %v448 = vunpack.c.l.b16 %v242
      %v449 = vunpack.c.l.b16 %v243
      %v450 = vunpack.c.l.b16 %v244
      %v451 = vunpack.c.l.b16 %v245
      %v452 = vunpack.c.l.b16 %v246
      %v453 = vunpack.c.l.b16 %v247
      %v454 = vunpack.c.l.b16 %v248
      %v455 = vunpack.c.l.b16 %v249
      %v456 = vunpack.c.l.b16 %v250
      %v457 = vunpack.c.l.b16 %v251
      %v458 = vunpack.c.l.b16 %v252
      %v459 = vunpack.c.l.b16 %v253
      %v460 = vunpack.c.l.b16 %v254
      %v461 = vunpack.c.l.b16 %v255
      %v462 = vunpack.c.l.b16 %v256
      %v463 = vunpack.c.l.b16 %v257
      %v464 = vunpack.c.l.b16 %v258
      %v465 = vunpack.c.l.b16 %v259
      %v466 = vunpack.c.l.b16 %v260
      %v467 = vunpack.c.l.b16 %v261
      %v468 = vunpack.c.l.b16 %v262
      %v469 = vunpack.c.l.b16 %v263
      %v470 = vunpack.c.l.b16 %v264
      %v471 = vunpack.c.l.b16 %v265
      %v472 = vunpack.c.l.b16 %v266
      %v473 = vunpack.c.l.b16 %v267
      %v474 = vunpack.c.l.b16 %v268
      %v475 = vunpack.c.l.b16 %v269
      %v476 = vunpack.c.l.b16 %v270
      %v477 = vunpack.c.l.b16 %v271
      %v478 = vpack.c.b16 %v379, %v378
      %v479 = vpack.c.b16 %v381, %v380
      %v480 = vpack.c.b16 %v383, %v382
      %v481 = vpack.c.b16 %v385, %v384
      %v482 = vpack.c.b16 %v387, %v386
      %v483 = vpack.c.b16 %v389, %v388
      %v484 = vpack.c.b16 %v391, %v390
      %v485 = vpack.c.b16 %v393, %v392
      %v486 = vpack.c.b16 %v395, %v394
      %v487 = vpack.c.b16 %v397, %v396
      %v488 = vpack.c.b16 %v399, %v398
      %v489 = vpack.c.b16 %v401, %v400
      %v490 = vpack.c.b16 %v403, %v402
      %v491 = vpack.c.b16 %v405, %v404
      %v492 = vpack.c.b16 %v407, %v406
      %v493 = vpack.c.b16 %v409, %v408
      %v494 = vpack.c.b16 %v411, %v410
      %v495 = vpack.c.b16 %v413, %v412
      %v496 = vpack.c.b16 %v415, %v414
      %v497 = vpack.c.b16 %v417, %v416
      %v498 = vpack.c.b16 %v419, %v418
      %v499 = vpack.c.b16 %v421, %v420
      %v500 = vpack.c.b16 %v423, %v422
      %v501 = vpack.c.b16 %v425, %v424
      %v502 = vpack.c.b16 %v427, %v426
      %v503 = vpack.c.b16 %v429, %v428
      %v504 = vpack.c.b16 %v431, %v430
      %v505 = vpack.c.b16 %v433, %v432
      %v506 = vpack.c.b16 %v435, %v434
      %v507 = vpack.c.b16 %v437, %v436
      %v508 = vpack.c.b16 %v439, %v438
      %v509 = vpack.c.b16 %v441, %v440
      %v510 = vpack.c.b16 %v443, %v442
      %v511 = vpack.c.b16 %v445, %v444
      %v512 = vpack.c.b16 %v447, %v446
      %v513 = vpack.c.b16 %v449, %v448
      %v514 = vpack.c.b16 %v451, %v450
      %v515 = vpack.c.b16 %v453, %v452
      %v516 = vpack.c.b16 %v455, %v454
      %v517 = vpack.c.b16 %v457, %v456
      %v518 = vpack.c.b16 %v459, %v458
      %v519 = vpack.c.b16 %v461, %v460
      %v520 = vpack.c.b16 %v463, %v462
      %v521 = vpack.c.b16 %v465, %v464
      %v522 = vpack.c.b16 %v467, %v466
      %v523 = vpack.c.b16 %v469, %v468
      %v524 = vpack.c.b16 %v471, %v470
      %v525 = vpack.c.b16 %v473, %v472
      %v526 = vpack.c.b16 %v475, %v474
      %v527 = vpack.c.b16 %v477, %v476
      %v530 = vunpack.c.l.b16 %v272
      %v531 = vunpack.c.l.b16 %v273
      %v532 = vpack.c.b16 %v531, %v530
      %vm533 = vcmask 72704
      %v535 = vsel %vm533, %v478, 0
      %v538 = vsel %vm533, %v479, 0
      %v541 = vsel %vm533, %v480, 0
      %v544 = vsel %vm533, %v481, 0
      %v547 = vsel %vm533, %v482, 0
      %v550 = vsel %vm533, %v483, 0
      %v553 = vsel %vm533, %v484, 0
      %v556 = vsel %vm533, %v485, 0
      %v559 = vsel %vm533, %v486, 0
      %v562 = vsel %vm533, %v487, 0
      %v565 = vsel %vm533, %v488, 0
      %v568 = vsel %vm533, %v489, 0
      %v571 = vsel %vm533, %v490, 0
      %v574 = vsel %vm533, %v491, 0
      %v577 = vsel %vm533, %v492, 0
      %v580 = vsel %vm533, %v493, 0
      %v583 = vsel %vm533, %v494, 0
      %v586 = vsel %vm533, %v495, 0
      %v589 = vsel %vm533, %v496, 0
      %v592 = vsel %vm533, %v497, 0
      %v595 = vsel %vm533, %v498, 0
      %v598 = vsel %vm533, %v499, 0
      %v601 = vsel %vm533, %v500, 0
      %v604 = vsel %vm533, %v501, 0
      %v607 = vsel %vm533, %v502, 0
      %v610 = vsel %vm533, %v503, 0
      %v613 = vsel %vm533, %v504, 0
      %v616 = vsel %vm533, %v505, 0
      %v619 = vsel %vm533, %v506, 0
      %v622 = vsel %vm533, %v507, 0
      %v625 = vsel %vm533, %v508, 0
      %v628 = vsel %vm533, %v509, 0
      %v631 = vsel %vm533, %v510, 0
      %v634 = vsel %vm533, %v511, 0
      %v637 = vsel %vm533, %v512, 0
      %v640 = vsel %vm533, %v513, 0
      %v643 = vsel %vm533, %v514, 0
      %v646 = vsel %vm533, %v515, 0
      %v649 = vsel %vm533, %v516, 0
      %v652 = vsel %vm533, %v517, 0
      %v655 = vsel %vm533, %v518, 0
      %v658 = vsel %vm533, %v519, 0
      %v661 = vsel %vm533, %v520, 0
      %v664 = vsel %vm533, %v521, 0
      %v667 = vsel %vm533, %v522, 0
      %v670 = vsel %vm533, %v523, 0
      %v673 = vsel %vm533, %v524, 0
      %v676 = vsel %vm533, %v525, 0
      %v679 = vsel %vm533, %v526, 0
      %v682 = vsel %vm533, %v527, 0
      %vm684 = vcmask 1043456
      %vm685 = vcmask 1044480
      %v686 = vsel %vm684, 4294967295, 65535
      %v687 = vsel %vm685, %v686, 0
      %v689 = vand.u32 %v532, %v687
      %691 = vmatpush.bf16.msra.mxu0 0
      %692 = vmatpush.bf16.msra.mxu0 0
      %693 = vmatpush.bf16.msra.mxu0 0
      %694 = vmatpush.bf16.msra.mxu0 0
      %695 = vmatpush.bf16.msra.mxu0 0
      %696 = vmatpush.bf16.msra.mxu0 0
      %697 = vmatpush.bf16.msra.mxu0 0
      %698 = vmatpush.bf16.msra.mxu0 %v689
      %699 = vmatmul.bf16.gmra.mxu0 %v535
      %v700 = vpop.f32.mrf.mxu0
      %v701 = vadd.f32 %v276, %v700
      %v702 = vpop.f32.mrf.mxu0
      %v703 = vadd.f32 %v276, %v702
      %704 = vmatmul.bf16.gmra.mxu0 %v538
      %v705 = vpop.f32.mrf.mxu0
      %v706 = vadd.f32 %v276, %v705
      %v707 = vpop.f32.mrf.mxu0
      %v708 = vadd.f32 %v276, %v707
      %709 = vmatmul.bf16.gmra.mxu0 %v541
      %v710 = vpop.f32.mrf.mxu0
      %v711 = vadd.f32 %v276, %v710
      %v712 = vpop.f32.mrf.mxu0
      %v713 = vadd.f32 %v276, %v712
      %714 = vmatmul.bf16.gmra.mxu0 %v544
      %v715 = vpop.f32.mrf.mxu0
      %v716 = vadd.f32 %v276, %v715
      %v717 = vpop.f32.mrf.mxu0
      %v718 = vadd.f32 %v276, %v717
      %719 = vmatmul.bf16.gmra.mxu0 %v547
      %v720 = vpop.f32.mrf.mxu0
      %v721 = vadd.f32 %v276, %v720
      %v722 = vpop.f32.mrf.mxu0
      %v723 = vadd.f32 %v276, %v722
      %724 = vmatmul.bf16.gmra.mxu0 %v550
      %v725 = vpop.f32.mrf.mxu0
      %v726 = vadd.f32 %v276, %v725
      %v727 = vpop.f32.mrf.mxu0
      %v728 = vadd.f32 %v276, %v727
      %729 = vmatmul.bf16.gmra.mxu0 %v553
      %v730 = vpop.f32.mrf.mxu0
      %v731 = vadd.f32 %v276, %v730
      %v732 = vpop.f32.mrf.mxu0
      %v733 = vadd.f32 %v276, %v732
      %734 = vmatmul.bf16.gmra.mxu0 %v556
      %v735 = vpop.f32.mrf.mxu0
      %v736 = vadd.f32 %v276, %v735
      %v737 = vpop.f32.mrf.mxu0
      %v738 = vadd.f32 %v276, %v737
      %739 = vmatmul.bf16.gmra.mxu0 %v559
      %v740 = vpop.f32.mrf.mxu0
      %v741 = vadd.f32 %v276, %v740
      %v742 = vpop.f32.mrf.mxu0
      %v743 = vadd.f32 %v276, %v742
      %744 = vmatmul.bf16.gmra.mxu0 %v562
      %v745 = vpop.f32.mrf.mxu0
      %v746 = vadd.f32 %v276, %v745
      %v747 = vpop.f32.mrf.mxu0
      %v748 = vadd.f32 %v276, %v747
      %749 = vmatmul.bf16.gmra.mxu0 %v565
      %v750 = vpop.f32.mrf.mxu0
      %v751 = vadd.f32 %v276, %v750
      %v752 = vpop.f32.mrf.mxu0
      %v753 = vadd.f32 %v276, %v752
      %754 = vmatmul.bf16.gmra.mxu0 %v568
      %v755 = vpop.f32.mrf.mxu0
      %v756 = vadd.f32 %v276, %v755
      %v757 = vpop.f32.mrf.mxu0
      %v758 = vadd.f32 %v276, %v757
      %759 = vmatmul.bf16.gmra.mxu0 %v571
      %v760 = vpop.f32.mrf.mxu0
      %v761 = vadd.f32 %v276, %v760
      %v762 = vpop.f32.mrf.mxu0
      %v763 = vadd.f32 %v276, %v762
      %764 = vmatmul.bf16.gmra.mxu0 %v574
      %v765 = vpop.f32.mrf.mxu0
      %v766 = vadd.f32 %v276, %v765
      %v767 = vpop.f32.mrf.mxu0
      %v768 = vadd.f32 %v276, %v767
      %769 = vmatmul.bf16.gmra.mxu0 %v577
      %v770 = vpop.f32.mrf.mxu0
      %v771 = vadd.f32 %v276, %v770
      %v772 = vpop.f32.mrf.mxu0
      %v773 = vadd.f32 %v276, %v772
      %774 = vmatmul.bf16.gmra.mxu0 %v580
      %v775 = vpop.f32.mrf.mxu0
      %v776 = vadd.f32 %v276, %v775
      %v777 = vpop.f32.mrf.mxu0
      %v778 = vadd.f32 %v276, %v777
      %779 = vmatmul.bf16.gmra.mxu0 %v583
      %v780 = vpop.f32.mrf.mxu0
      %v781 = vadd.f32 %v276, %v780
      %v782 = vpop.f32.mrf.mxu0
      %v783 = vadd.f32 %v276, %v782
      %784 = vmatmul.bf16.gmra.mxu0 %v586
      %v785 = vpop.f32.mrf.mxu0
      %v786 = vadd.f32 %v276, %v785
      %v787 = vpop.f32.mrf.mxu0
      %v788 = vadd.f32 %v276, %v787
      %789 = vmatmul.bf16.gmra.mxu0 %v589
      %v790 = vpop.f32.mrf.mxu0
      %v791 = vadd.f32 %v276, %v790
      %v792 = vpop.f32.mrf.mxu0
      %v793 = vadd.f32 %v276, %v792
      %794 = vmatmul.bf16.gmra.mxu0 %v592
      %v795 = vpop.f32.mrf.mxu0
      %v796 = vadd.f32 %v276, %v795
      %v797 = vpop.f32.mrf.mxu0
      %v798 = vadd.f32 %v276, %v797
      %799 = vmatmul.bf16.gmra.mxu0 %v595
      %v800 = vpop.f32.mrf.mxu0
      %v801 = vadd.f32 %v276, %v800
      %v802 = vpop.f32.mrf.mxu0
      %v803 = vadd.f32 %v276, %v802
      %804 = vmatmul.bf16.gmra.mxu0 %v598
      %v805 = vpop.f32.mrf.mxu0
      %v806 = vadd.f32 %v276, %v805
      %v807 = vpop.f32.mrf.mxu0
      %v808 = vadd.f32 %v276, %v807
      %809 = vmatmul.bf16.gmra.mxu0 %v601
      %v810 = vpop.f32.mrf.mxu0
      %v811 = vadd.f32 %v276, %v810
      %v812 = vpop.f32.mrf.mxu0
      %v813 = vadd.f32 %v276, %v812
      %814 = vmatmul.bf16.gmra.mxu0 %v604
      %v815 = vpop.f32.mrf.mxu0
      %v816 = vadd.f32 %v276, %v815
      %v817 = vpop.f32.mrf.mxu0
      %v818 = vadd.f32 %v276, %v817
      %819 = vmatmul.bf16.gmra.mxu0 %v607
      %v820 = vpop.f32.mrf.mxu0
      %v821 = vadd.f32 %v276, %v820
      %v822 = vpop.f32.mrf.mxu0
      %v823 = vadd.f32 %v276, %v822
      %824 = vmatmul.bf16.gmra.mxu0 %v610
      %v825 = vpop.f32.mrf.mxu0
      %v826 = vadd.f32 %v276, %v825
      %v827 = vpop.f32.mrf.mxu0
      %v828 = vadd.f32 %v276, %v827
      %829 = vmatmul.bf16.gmra.mxu0 %v613
      %v830 = vpop.f32.mrf.mxu0
      %v831 = vadd.f32 %v276, %v830
      %v832 = vpop.f32.mrf.mxu0
      %v833 = vadd.f32 %v276, %v832
      %834 = vmatmul.bf16.gmra.mxu0 %v616
      %v835 = vpop.f32.mrf.mxu0
      %v836 = vadd.f32 %v276, %v835
      %v837 = vpop.f32.mrf.mxu0
      %v838 = vadd.f32 %v276, %v837
      %839 = vmatmul.bf16.gmra.mxu0 %v619
      %v840 = vpop.f32.mrf.mxu0
      %v841 = vadd.f32 %v276, %v840
      %v842 = vpop.f32.mrf.mxu0
      %v843 = vadd.f32 %v276, %v842
      %844 = vmatmul.bf16.gmra.mxu0 %v622
      %v845 = vpop.f32.mrf.mxu0
      %v846 = vadd.f32 %v276, %v845
      %v847 = vpop.f32.mrf.mxu0
      %v848 = vadd.f32 %v276, %v847
      %849 = vmatmul.bf16.gmra.mxu0 %v625
      %v850 = vpop.f32.mrf.mxu0
      %v851 = vadd.f32 %v276, %v850
      %v852 = vpop.f32.mrf.mxu0
      %v853 = vadd.f32 %v276, %v852
      %854 = vmatmul.bf16.gmra.mxu0 %v628
      %v855 = vpop.f32.mrf.mxu0
      %v856 = vadd.f32 %v276, %v855
      %v857 = vpop.f32.mrf.mxu0
      %v858 = vadd.f32 %v276, %v857
      %859 = vmatmul.bf16.gmra.mxu0 %v631
      %v860 = vpop.f32.mrf.mxu0
      %v861 = vadd.f32 %v276, %v860
      %v862 = vpop.f32.mrf.mxu0
      %v863 = vadd.f32 %v276, %v862
      %864 = vmatmul.bf16.gmra.mxu0 %v634
      %v865 = vpop.f32.mrf.mxu0
      %v866 = vadd.f32 %v276, %v865
      %v867 = vpop.f32.mrf.mxu0
      %v868 = vadd.f32 %v276, %v867
      %869 = vmatmul.bf16.gmra.mxu0 %v637
      %v870 = vpop.f32.mrf.mxu0
      %v871 = vadd.f32 %v276, %v870
      %v872 = vpop.f32.mrf.mxu0
      %v873 = vadd.f32 %v276, %v872
      %874 = vmatmul.bf16.gmra.mxu0 %v640
      %v875 = vpop.f32.mrf.mxu0
      %v876 = vadd.f32 %v276, %v875
      %v877 = vpop.f32.mrf.mxu0
      %v878 = vadd.f32 %v276, %v877
      %879 = vmatmul.bf16.gmra.mxu0 %v643
      %v880 = vpop.f32.mrf.mxu0
      %v881 = vadd.f32 %v276, %v880
      %v882 = vpop.f32.mrf.mxu0
      %v883 = vadd.f32 %v276, %v882
      %884 = vmatmul.bf16.gmra.mxu0 %v646
      %v885 = vpop.f32.mrf.mxu0
      %v886 = vadd.f32 %v276, %v885
      %v887 = vpop.f32.mrf.mxu0
      %v888 = vadd.f32 %v276, %v887
      %889 = vmatmul.bf16.gmra.mxu0 %v649
      %v890 = vpop.f32.mrf.mxu0
      %v891 = vadd.f32 %v276, %v890
      %v892 = vpop.f32.mrf.mxu0
      %v893 = vadd.f32 %v276, %v892
      %894 = vmatmul.bf16.gmra.mxu0 %v652
      %v895 = vpop.f32.mrf.mxu0
      %v896 = vadd.f32 %v276, %v895
      %v897 = vpop.f32.mrf.mxu0
      %v898 = vadd.f32 %v276, %v897
      %899 = vmatmul.bf16.gmra.mxu0 %v655
      %v900 = vpop.f32.mrf.mxu0
      %v901 = vadd.f32 %v276, %v900
      %v902 = vpop.f32.mrf.mxu0
      %v903 = vadd.f32 %v276, %v902
      %904 = vmatmul.bf16.gmra.mxu0 %v658
      %v905 = vpop.f32.mrf.mxu0
      %v906 = vadd.f32 %v276, %v905
      %v907 = vpop.f32.mrf.mxu0
      %v908 = vadd.f32 %v276, %v907
      %909 = vmatmul.bf16.gmra.mxu0 %v661
      %v910 = vpop.f32.mrf.mxu0
      %v911 = vadd.f32 %v276, %v910
      %v912 = vpop.f32.mrf.mxu0
      %v913 = vadd.f32 %v276, %v912
      %914 = vmatmul.bf16.gmra.mxu0 %v664
      %v915 = vpop.f32.mrf.mxu0
      %v916 = vadd.f32 %v276, %v915
      %v917 = vpop.f32.mrf.mxu0
      %v918 = vadd.f32 %v276, %v917
      %919 = vmatmul.bf16.gmra.mxu0 %v667
      %v920 = vpop.f32.mrf.mxu0
      %v921 = vadd.f32 %v276, %v920
      %v922 = vpop.f32.mrf.mxu0
      %v923 = vadd.f32 %v276, %v922
      %924 = vmatmul.bf16.gmra.mxu0 %v670
      %v925 = vpop.f32.mrf.mxu0
      %v926 = vadd.f32 %v276, %v925
      %v927 = vpop.f32.mrf.mxu0
      %v928 = vadd.f32 %v276, %v927
      %929 = vmatmul.bf16.gmra.mxu0 %v673
      %v930 = vpop.f32.mrf.mxu0
      %v931 = vadd.f32 %v276, %v930
      %v932 = vpop.f32.mrf.mxu0
      %v933 = vadd.f32 %v276, %v932
      %934 = vmatmul.bf16.gmra.mxu0 %v676
      %v935 = vpop.f32.mrf.mxu0
      %v936 = vadd.f32 %v276, %v935
      %v937 = vpop.f32.mrf.mxu0
      %v938 = vadd.f32 %v276, %v937
      %939 = vmatmul.bf16.gmra.mxu0 %v679
      %v940 = vpop.f32.mrf.mxu0
      %v941 = vadd.f32 %v276, %v940
      %v942 = vpop.f32.mrf.mxu0
      %v943 = vadd.f32 %v276, %v942
      %944 = vmatmul.bf16.gmra.mxu0 %v682
      %v945 = vpop.f32.mrf.mxu0
      %v946 = vadd.f32 %v276, %v945
      %v947 = vpop.f32.mrf.mxu0
      %v948 = vadd.f32 %v276, %v947
      %949 = vdwg.mxu0
      %v950 = vmax.f32 %v701, %v763
      %v951 = vmax.f32 %v703, %v766
      %v952 = vmax.f32 %v706, %v768
      %v953 = vmax.f32 %v708, %v771
      %v954 = vmax.f32 %v711, %v773
      %v955 = vmax.f32 %v713, %v776
      %v956 = vmax.f32 %v716, %v778
      %v957 = vmax.f32 %v718, %v781
      %v958 = vmax.f32 %v721, %v783
      %v959 = vmax.f32 %v723, %v786
      %v960 = vmax.f32 %v726, %v788
      %v961 = vmax.f32 %v728, %v791
      %v962 = vmax.f32 %v731, %v793
      %v963 = vmax.f32 %v733, %v796
      %v964 = vmax.f32 %v736, %v798
      %v965 = vmax.f32 %v738, %v801
      %v966 = vmax.f32 %v741, %v803
      %v967 = vmax.f32 %v743, %v806
      %v968 = vmax.f32 %v746, %v808
      %v969 = vmax.f32 %v748, %v811
      %v970 = vmax.f32 %v751, %v813
      %v971 = vmax.f32 %v753, %v816
      %v972 = vmax.f32 %v756, %v818
      %v973 = vmax.f32 %v758, %v821
      %v974 = vmax.f32 %v761, %v823
      %v975 = vmax.f32 %v826, %v888
      %v976 = vmax.f32 %v828, %v891
      %v977 = vmax.f32 %v831, %v893
      %v978 = vmax.f32 %v833, %v896
      %v979 = vmax.f32 %v836, %v898
      %v980 = vmax.f32 %v838, %v901
      %v981 = vmax.f32 %v841, %v903
      %v982 = vmax.f32 %v843, %v906
      %v983 = vmax.f32 %v846, %v908
      %v984 = vmax.f32 %v848, %v911
      %v985 = vmax.f32 %v851, %v913
      %v986 = vmax.f32 %v853, %v916
      %v987 = vmax.f32 %v856, %v918
      %v988 = vmax.f32 %v858, %v921
      %v989 = vmax.f32 %v861, %v923
      %v990 = vmax.f32 %v863, %v926
      %v991 = vmax.f32 %v866, %v928
      %v992 = vmax.f32 %v868, %v931
      %v993 = vmax.f32 %v871, %v933
      %v994 = vmax.f32 %v873, %v936
      %v995 = vmax.f32 %v876, %v938
      %v996 = vmax.f32 %v878, %v941
      %v997 = vmax.f32 %v881, %v943
      %v998 = vmax.f32 %v883, %v946
      %v999 = vmax.f32 %v886, %v948
      %v1000 = vmax.f32 %v950, %v975
      %v1001 = vmax.f32 %v951, %v976
      %v1002 = vmax.f32 %v952, %v977
      %v1003 = vmax.f32 %v953, %v978
      %v1004 = vmax.f32 %v954, %v979
      %v1005 = vmax.f32 %v955, %v980
      %v1006 = vmax.f32 %v956, %v981
      %v1007 = vmax.f32 %v957, %v982
      %v1008 = vmax.f32 %v958, %v983
      %v1009 = vmax.f32 %v959, %v984
      %v1010 = vmax.f32 %v960, %v985
      %v1011 = vmax.f32 %v961, %v986
      %v1012 = vmax.f32 %v962, %v987
      %v1013 = vmax.f32 %v963, %v988
      %v1014 = vmax.f32 %v964, %v989
      %v1015 = vmax.f32 %v965, %v990
      %v1016 = vmax.f32 %v966, %v991
      %v1017 = vmax.f32 %v967, %v992
      %v1018 = vmax.f32 %v968, %v993
      %v1019 = vmax.f32 %v969, %v994
      %v1020 = vmax.f32 %v970, %v995
      %v1021 = vmax.f32 %v971, %v996
      %v1022 = vmax.f32 %v972, %v997
      %v1023 = vmax.f32 %v973, %v998
      %v1024 = vmax.f32 %v974, %v999
      %1025 = vst [vmem:[%s170] sm:$0xff] %v1000
      %1026 = vst [vmem:[%s170 + $0x8] sm:$0xff] %v1001
      %1027 = vst [vmem:[%s170 + $0x10] sm:$0xff] %v1002
      %1028 = vst [vmem:[%s170 + $0x18] sm:$0xff] %v1003
      %1029 = vst [vmem:[%s170 + $0x20] sm:$0xff] %v1004
      %1030 = vst [vmem:[%s170 + $0x28] sm:$0xff] %v1005
      %1031 = vst [vmem:[%s170 + $0x30] sm:$0xff] %v1006
      %1032 = vst [vmem:[%s170 + $0x38] sm:$0xff] %v1007
      %1033 = vst [vmem:[%s170 + $0x40] sm:$0xff] %v1008
      %1034 = vst [vmem:[%s170 + $0x48] sm:$0xff] %v1009
      %1035 = vst [vmem:[%s170 + $0x50] sm:$0xff] %v1010
      %1036 = vst [vmem:[%s170 + $0x58] sm:$0xff] %v1011
      %1037 = vst [vmem:[%s170 + $0x60] sm:$0xff] %v1012
      %1038 = vst [vmem:[%s170 + $0x68] sm:$0xff] %v1013
      %1039 = vst [vmem:[%s170 + $0x70] sm:$0xff] %v1014
      %1040 = vst [vmem:[%s170 + $0x78] sm:$0xff] %v1015
      %1041 = vst [vmem:[%s170 + $0x80] sm:$0xff] %v1016
      %1042 = vst [vmem:[%s170 + $0x88] sm:$0xff] %v1017
      %1043 = vst [vmem:[%s170 + $0x90] sm:$0xff] %v1018
      %1044 = vst [vmem:[%s170 + $0x98] sm:$0xff] %v1019
      %1045 = vst [vmem:[%s170 + $0xa0] sm:$0xff] %v1020
      %1046 = vst [vmem:[%s170 + $0xa8] sm:$0xff] %v1021
      %1047 = vst [vmem:[%s170 + $0xb0] sm:$0xff] %v1022
      %1048 = vst [vmem:[%s170 + $0xb8] sm:$0xff] %v1023
      %1049 = vst [vmem:[%s170 + $0xc0] sm:$0xff] %v1024
      %p1050 = scmp.lt.s32.totalorder %s14, 1
      %s1051 = scalar_select %p1050, %s14, 1
      %s1052 = smul.addr %s1051, 25
      %s1053 = smul.addr %s1052, 8
      %s1054 = scalar_lea.vmem %s3, %s1053
      // Predicated region
      $region33: #{lenet_forward.3} parent=31 // pred_check
        %p1055 = pneg %p100
      $region34: #{lenet_forward.3} parent=31 // pred_check_branch
        %1057 = sbr.rel (%p1055) target = $region36
      $region35: #{lenet_forward.3} parent=31 // pred_region
        _
      $region36: #{lenet_forward.3} parent=31 // pred_fallthru
        _
    $region32: #{lenet_forward.3} parent=5 // pred_fallthru
      _
    %p1058 = scmp.le.s32.totalorder 2, %s9
    // Predicated region
    $region37: #{lenet_forward.3} parent=5 // pred_check
      %p1059 = pneg %p1058
    $region38: #{lenet_forward.3} parent=5 // pred_check_branch
      %1061 = sbr.rel (%p1059) target = $region40
    $region39: #{lenet_forward.3} parent=5 // pred_region
      %s1062 = ssub.s32 %s9, 2
      // Predicated region
      $region41: #{lenet_forward.3} parent=39 // pred_check
        %p1063 = pneg %p106
      $region42: #{lenet_forward.3} parent=39 // pred_check_branch
        %1065 = sbr.rel (%p1063) target = $region44
      $region43: #{lenet_forward.3} parent=39 // pred_region
        %p1066 = scmp.lt.s32.totalorder %s15, 1
        %s1067 = scalar_select %p1066, %s15, 1
        %s1068 = smul.addr %s1067, 25
        %s1069 = smul.addr %s1068, 8
        %s1070 = scalar_lea.vmem %s3, %s1069
      $region44: #{lenet_forward.3} parent=39 // pred_fallthru
        _
    $region40: #{lenet_forward.3} parent=5 // pred_fallthru
      _
  $region6: #{lenet_forward.3} parent=0 // loop_footer
    %s13 = sadd.s32 1, %s9
  $region7: #{lenet_forward.3} parent=0 // loop_footer_branch
    %8 = sbr.rel target = $region3
  $region8: #{lenet_forward.3} parent=0 // loop_exit
    _

// kernel: lenet_forward.4
$region0: #{lenet_forward.4}
  #allocation0 [shape = 'u32[]', space=smem, size = 0x4, offset = 0x4, fixed_abs, tag = 'smem constant byte address 0x4 - core index']
  #allocation1 [shape = 'u32[72,128]{1,0:T(1,128)}', space=vmem, size = 0x9000, scoped, tag = 'internal scratch']
  %s0 = inlined_call_operand.vmem [shape: bf16[2,128,150], index: 0, kind: input, shape index: {}]
  %s1 = inlined_call_operand.vmem [shape: bf16[150,128], index: 1, kind: input, shape index: {}]
  %s2 = inlined_call_operand.vmem [shape: f32[1,128], index: 2, kind: input, shape index: {}]
  %s3 = inlined_call_operand.vmem [shape: f32[2,32,128], index: 3, kind: output, shape index: {}]
  %s4 = sld [smem:[#allocation0]]
  $region45: #{lenet_forward.4} parent=0
    _
  %s6 = ssub.s32 1, %s4
  %s7 = scalar_select 0, %s6, %s4
  loop: start=0, step=1, limit=4
  $region2: #{lenet_forward.4} parent=0 // loop_pre_header
    _
  $region3: #{lenet_forward.4} parent=0 // loop_header
    %s9 = sphi 0, %s13
    %p10 = scmp.ge.s32.totalorder %s9, 4
    %s19 = sphi 0, %s21
    %s22 = sphi 0, %s19
    %s23 = sphi 0, %s22
    %s39 = sphi 0, %s23
    %s43 = sphi 0, %s43
    %s45 = sphi 0, %s43
    %s46 = sphi 0, %s45
    %s60 = sphi 0, %s46
    %s64 = sphi 0, %s64
    %s66 = sphi 0, %s64
    %s67 = sphi 0, %s66
    %s81 = sphi 0, %s67
    %s87 = sphi 0, %s89
    %s90 = sphi 0, %s87
    %s91 = sphi 0, %s90
    %s107 = sphi 0, %s91
  $region4: #{lenet_forward.4} parent=0 // loop_header_branch
    %12 = sbr.rel (%p10) target = $region8
  $region5: #{lenet_forward.4} parent=0 // loop_body
    %s14 = ssub.s32 %s9, 1
    %s15 = ssub.s32 %s9, 2
    %s16 = sadd.s32 %s9, 1
    %s17 = ssub.s32 %s9, %s16
    %p18 = scmp.eq.s32.totalorder %s17, 0
    %s20 = sadd.s32 %s19, 1
    %s21 = scalar_select %p18, %s19, %s20
    %p24 = pneg %p18
    %p25 = scmp.eq.s32.totalorder %s9, 1
    %p26 = por %p24, %p25
    %p27 = scmp.ne.s32.totalorder %s19, %s22
    %p28 = scmp.eq.s32.totalorder %s9, 0
    %p29 = por %p27, %p28
    %p30 = scmp.ne.s32.totalorder %s19, %s22
    %p31 = scmp.eq.s32.totalorder %s14, 1
    %p32 = por %p30, %p31
    %p33 = scmp.ne.s32.totalorder %s22, %s23
    %p34 = scmp.eq.s32.totalorder %s14, 0
    %p35 = por %p33, %p34
    %p36 = scmp.ne.s32.totalorder %s22, %s23
    %p37 = scmp.eq.s32.totalorder %s15, 1
    %p38 = por %p36, %p37
    %p40 = scmp.ne.s32.totalorder %s23, %s39
    %p41 = scmp.eq.s32.totalorder %s15, 0
    %p42 = por %p40, %p41
    %s44 = sadd.s32 %s43, 1
    %p47 = scmp.eq.s32.totalorder %s9, 1
    %p48 = scmp.ne.s32.totalorder %s43, %s45
    %p49 = scmp.eq.s32.totalorder %s9, 0
    %p50 = por %p48, %p49
    %p51 = scmp.ne.s32.totalorder %s43, %s45
    %p52 = scmp.eq.s32.totalorder %s14, 1
    %p53 = por %p51, %p52
    %p54 = scmp.ne.s32.totalorder %s45, %s46
    %p55 = scmp.eq.s32.totalorder %s14, 0
    %p56 = por %p54, %p55
    %p57 = scmp.ne.s32.totalorder %s45, %s46
    %p58 = scmp.eq.s32.totalorder %s15, 1
    %p59 = por %p57, %p58
    %p61 = scmp.ne.s32.totalorder %s46, %s60
    %p62 = scmp.eq.s32.totalorder %s15, 0
    %p63 = por %p61, %p62
    %s65 = sadd.s32 %s64, 1
    %p68 = scmp.eq.s32.totalorder %s9, 1
    %p69 = scmp.ne.s32.totalorder %s64, %s66
    %p70 = scmp.eq.s32.totalorder %s9, 0
    %p71 = por %p69, %p70
    %p72 = scmp.ne.s32.totalorder %s64, %s66
    %p73 = scmp.eq.s32.totalorder %s14, 1
    %p74 = por %p72, %p73
    %p75 = scmp.ne.s32.totalorder %s66, %s67
    %p76 = scmp.eq.s32.totalorder %s14, 0
    %p77 = por %p75, %p76
    %p78 = scmp.ne.s32.totalorder %s66, %s67
    %p79 = scmp.eq.s32.totalorder %s15, 1
    %p80 = por %p78, %p79
    %p82 = scmp.ne.s32.totalorder %s67, %s81
    %p83 = scmp.eq.s32.totalorder %s15, 0
    %p84 = por %p82, %p83
    %s85 = ssub.s32 %s9, %s16
    %p86 = scmp.eq.s32.totalorder %s85, 0
    %s88 = sadd.s32 %s87, 1
    %s89 = scalar_select %p86, %s87, %s88
    %p92 = pneg %p86
    %p93 = scmp.eq.s32.totalorder %s9, 1
    %p94 = por %p92, %p93
    %p95 = scmp.ne.s32.totalorder %s87, %s90
    %p96 = scmp.eq.s32.totalorder %s9, 0
    %p97 = por %p95, %p96
    %p98 = scmp.ne.s32.totalorder %s87, %s90
    %p99 = scmp.eq.s32.totalorder %s14, 1
    %p100 = por %p98, %p99
    %p101 = scmp.ne.s32.totalorder %s90, %s91
    %p102 = scmp.eq.s32.totalorder %s14, 0
    %p103 = por %p101, %p102
    %p104 = scmp.ne.s32.totalorder %s90, %s91
    %p105 = scmp.eq.s32.totalorder %s15, 1
    %p106 = por %p104, %p105
    %p108 = scmp.ne.s32.totalorder %s91, %s107
    %p109 = scmp.eq.s32.totalorder %s15, 0
    %p110 = por %p108, %p109
    %p111 = scmp.le.s32.totalorder 1, %s9
    %p112 = scmp.lt.s32.totalorder %s9, 3
    %p113 = pnand %p111, %p112
    %p114 = pneg %p113
    // Predicated region
    $region9: #{lenet_forward.4} parent=5 // pred_check
      _
    $region10: #{lenet_forward.4} parent=5 // pred_check_branch
      %116 = sbr.rel (%p113) target = $region12
    $region11: #{lenet_forward.4} parent=5 // pred_region
      %s117 = ssub.s32 %s9, 1
      // Predicated region
      $region13: #{lenet_forward.4} parent=11 // pred_check
        %p118 = pneg %p56
      $region14: #{lenet_forward.4} parent=11 // pred_check_branch
        %120 = sbr.rel (%p118) target = $region16
      $region15: #{lenet_forward.4} parent=11 // pred_region
        _
      $region16: #{lenet_forward.4} parent=11 // pred_fallthru
        _
      // Predicated region
      $region17: #{lenet_forward.4} parent=11 // pred_check
        %p121 = pneg %p77
      $region18: #{lenet_forward.4} parent=11 // pred_check_branch
        %123 = sbr.rel (%p121) target = $region20
      $region19: #{lenet_forward.4} parent=11 // pred_region
        _
      $region20: #{lenet_forward.4} parent=11 // pred_fallthru
        _
    $region12: #{lenet_forward.4} parent=5 // pred_fallthru
      _
    %p124 = scmp.lt.s32.totalorder %s9, 2
    // Predicated region
    $region21: #{lenet_forward.4} parent=5 // pred_check
      %p125 = pneg %p124
    $region22: #{lenet_forward.4} parent=5 // pred_check_branch
      %127 = sbr.rel (%p125) target = $region24
    $region23: #{lenet_forward.4} parent=5 // pred_region
      // Predicated region
      $region25: #{lenet_forward.4} parent=23 // pred_check
        %p128 = pneg %p29
      $region26: #{lenet_forward.4} parent=23 // pred_check_branch
        %130 = sbr.rel (%p128) target = $region28
      $region27: #{lenet_forward.4} parent=23 // pred_region
        %p131 = scmp.lt.s32.totalorder %s9, 1
        %s132 = scalar_select %p131, %s9, 1
        %s133 = smul.addr %s132, 32
        %s134 = smul.addr %s133, 4
        %s135 = scalar_lea.vmem %s0, %s134
      $region28: #{lenet_forward.4} parent=23 // pred_fallthru
        _
    $region24: #{lenet_forward.4} parent=5 // pred_fallthru
      _
    %p136 = scmp.le.s32.totalorder 1, %s9
    %p137 = scmp.lt.s32.totalorder %s9, 3
    %p138 = pnand %p136, %p137
    %p139 = pneg %p138
    // Predicated region
    $region29: #{lenet_forward.4} parent=5 // pred_check
      _
    $region30: #{lenet_forward.4} parent=5 // pred_check_branch
      %141 = sbr.rel (%p138) target = $region32
    $region31: #{lenet_forward.4} parent=5 // pred_region
      %s142 = ssub.s32 %s9, 1
      %p143 = scmp.lt.s32.totalorder %s14, 1
      %s144 = scalar_select %p143, %s14, 1
      %s145 = smul.addr %s144, 32
      %s146 = smul.addr %s145, 4
      %s147 = scalar_lea.vmem %s0, %s146
      %p148 = pneg %p35
      %p149 = pneg %p32
      %p150 = pneg %p56
      %p151 = pneg %p53
      %p152 = pneg %p77
      %p153 = pneg %p74
      %p154 = pneg %p103
      %p155 = pneg %p100
      %p156 = scmp.lt.s32.totalorder %s14, 1
      %s157 = scalar_select %p156, %s14, 1
      %s158 = smul.addr %s157, 4
      %s159 = smul.addr %s158, 8
      %s160 = scalar_lea.vmem %s3, %s159
      %p161 = scmp.lt.s32.totalorder %s14, 1
      %s162 = scalar_select %p161, %s14, 1
      %s163 = smul.addr %s162, 32
      %s164 = smul.addr %s163, 4
      %s165 = scalar_lea.vmem %s0, %s164
      %p166 = scmp.lt.s32.totalorder %s14, 1
      %s167 = scalar_select %p166, %s14, 1
      %s168 = smul.addr %s167, 4
      %s169 = smul.addr %s168, 8
      %s170 = scalar_lea.vmem %s3, %s169
      %v172 = vld [vmem:[%s165] sm:$0xff]
      %v173 = vld [vmem:[%s165 + $0x8] sm:$0xff]
      %v174 = vld [vmem:[%s165 + $0x10] sm:$0xff]
      %v175 = vld [vmem:[%s165 + $0x18] sm:$0xff]
      %v176 = vld [vmem:[%s165 + $0x20] sm:$0xff]
      %v177 = vld [vmem:[%s165 + $0x28] sm:$0xff]
      %v178 = vld [vmem:[%s165 + $0x30] sm:$0xff]
      %v179 = vld [vmem:[%s165 + $0x38] sm:$0xff]
      %v180 = vld [vmem:[%s165 + $0x40] sm:$0xff]
      %v181 = vld [vmem:[%s165 + $0x48] sm:$0xff]
      %v182 = vld [vmem:[%s165 + $0x50] sm:$0xff]
      %v183 = vld [vmem:[%s165 + $0x58] sm:$0xff]
      %v184 = vld [vmem:[%s165 + $0x60] sm:$0xff]
      %v185 = vld [vmem:[%s165 + $0x68] sm:$0xff]
      %v186 = vld [vmem:[%s165 + $0x70] sm:$0xff]
      %v187 = vld [vmem:[%s165 + $0x78] sm:$0xff]
      %v188 = vld [vmem:[%s1] sm:$0xf]
      %v189 = vld [vmem:[%s1 + $0x4] sm:$0xf]
      %v190 = vld [vmem:[%s1 + $0x8] sm:$0xf]
      %v191 = vld [vmem:[%s1 + $0xc] sm:$0xf]
      %v192 = vld [vmem:[%s1 + $0x10] sm:$0xf]
      %v193 = vld [vmem:[%s1 + $0x14] sm:$0xf]
      %v194 = vld [vmem:[%s1 + $0x18] sm:$0xf]
      %v195 = vld [vmem:[%s1 + $0x1c] sm:$0xf]
      %v196 = vld [vmem:[%s1 + $0x20] sm:$0xf]
      %v197 = vld [vmem:[%s1 + $0x24] sm:$0xf]
      %v198 = vld [vmem:[%s1 + $0x28] sm:$0xf]
      %v199 = vld [vmem:[%s1 + $0x2c] sm:$0xf]
      %v200 = vld [vmem:[%s1 + $0x30] sm:$0xf]
      %v201 = vld [vmem:[%s1 + $0x34] sm:$0xf]
      %v202 = vld [vmem:[%s1 + $0x38] sm:$0xf]
      %v203 = vld [vmem:[%s1 + $0x3c] sm:$0xf]
      %v204 = vld [vmem:[%s1 + $0x40] sm:$0xf]
      %v205 = vld [vmem:[%s1 + $0x44] sm:$0xf]
      %v206 = vld [vmem:[%s1 + $0x48] sm:$0x7]
      %v207 = vld [vmem:[%s2] sm:$0x1]
      %v209 = vperm.slane %v207, 0
      %v227 = vunpack.c.l.b16 %v172
      %v228 = vunpack.c.h.b16 %v172
      %v229 = vunpack.c.l.b16 %v173
      %v230 = vunpack.c.h.b16 %v173
      %v231 = vunpack.c.l.b16 %v174
      %v232 = vunpack.c.h.b16 %v174
      %v233 = vunpack.c.l.b16 %v175
      %v234 = vunpack.c.h.b16 %v175
      %v235 = vunpack.c.l.b16 %v176
      %v236 = vunpack.c.h.b16 %v176
      %v237 = vunpack.c.l.b16 %v177
      %v238 = vunpack.c.h.b16 %v177
      %v239 = vunpack.c.l.b16 %v178
      %v240 = vunpack.c.h.b16 %v178
      %v241 = vunpack.c.l.b16 %v179
      %v242 = vunpack.c.h.b16 %v179
      %v243 = vunpack.c.l.b16 %v180
      %v244 = vunpack.c.h.b16 %v180
      %v245 = vunpack.c.l.b16 %v181
      %v246 = vunpack.c.h.b16 %v181
      %v247 = vunpack.c.l.b16 %v182
      %v248 = vunpack.c.h.b16 %v182
      %v249 = vunpack.c.l.b16 %v183
      %v250 = vunpack.c.h.b16 %v183
      %v251 = vunpack.c.l.b16 %v184
      %v252 = vunpack.c.h.b16 %v184
      %v253 = vunpack.c.l.b16 %v185
      %v254 = vunpack.c.h.b16 %v185
      %v255 = vunpack.c.l.b16 %v186
      %v256 = vunpack.c.h.b16 %v186
      %v257 = vunpack.c.l.b16 %v187
      %v258 = vunpack.c.h.b16 %v187
      %v259 = vpack.c.b16 %v229, %v227
      %v260 = vpack.c.b16 %v230, %v228
      %v261 = vpack.c.b16 %v233, %v231
      %v262 = vpack.c.b16 %v234, %v232
      %v263 = vpack.c.b16 %v237, %v235
      %v264 = vpack.c.b16 %v238, %v236
      %v265 = vpack.c.b16 %v241, %v239
      %v266 = vpack.c.b16 %v242, %v240
      %v267 = vpack.c.b16 %v245, %v243
      %v268 = vpack.c.b16 %v246, %v244
      %v269 = vpack.c.b16 %v249, %v247
      %v270 = vpack.c.b16 %v250, %v248
      %v271 = vpack.c.b16 %v253, %v251
      %v272 = vpack.c.b16 %v254, %v252
      %v273 = vpack.c.b16 %v257, %v255
      %v274 = vpack.c.b16 %v258, %v256
      %v302 = vunpack.c.l.b16 %v188
      %v303 = vunpack.c.l.b16 %v189
      %v304 = vunpack.c.l.b16 %v190
      %v305 = vunpack.c.l.b16 %v191
      %v306 = vunpack.c.l.b16 %v192
      %v307 = vunpack.c.l.b16 %v193
      %v308 = vunpack.c.l.b16 %v194
      %v309 = vunpack.c.l.b16 %v195
      %v310 = vunpack.c.l.b16 %v196
      %v311 = vunpack.c.l.b16 %v197
      %v312 = vunpack.c.l.b16 %v198
      %v313 = vunpack.c.l.b16 %v199
      %v314 = vunpack.c.l.b16 %v200
      %v315 = vunpack.c.l.b16 %v201
      %v316 = vunpack.c.l.b16 %v202
      %v317 = vunpack.c.l.b16 %v203
      %v318 = vunpack.c.l.b16 %v204
      %v319 = vunpack.c.l.b16 %v205
      %v320 = vunpack.c.l.b16 %v206
      %v321 = vpack.c.b16 %v303, %v302
      %v322 = vpack.c.b16 %v305, %v304
      %v323 = vpack.c.b16 %v307, %v306
      %v324 = vpack.c.b16 %v309, %v308
      %v325 = vpack.c.b16 %v311, %v310
      %v326 = vpack.c.b16 %v313, %v312
      %v327 = vpack.c.b16 %v315, %v314
      %v328 = vpack.c.b16 %v317, %v316
      %v329 = vpack.c.b16 %v319, %v318
      %v330 = vpack.c.b16 %v320, %v320
      %vm340 = vcmask 179200
      %v342 = vsel %vm340, %v260, 0
      %v345 = vsel %vm340, %v262, 0
      %v348 = vsel %vm340, %v264, 0
      %v351 = vsel %vm340, %v266, 0
      %v354 = vsel %vm340, %v268, 0
      %v357 = vsel %vm340, %v270, 0
      %v360 = vsel %vm340, %v272, 0
      %v363 = vsel %vm340, %v274, 0
      %vm365 = vcmask 1042432
      %v367 = vsel %vm365, %v330, 0
      %369 = vmatpush.bf16.msra.mxu0 %v328
      %370 = vmatpush.bf16.msra.mxu0 %v327
      %371 = vmatpush.bf16.msra.mxu0 %v326
      %372 = vmatpush.bf16.msra.mxu0 %v325
      %373 = vmatpush.bf16.msra.mxu0 %v324
      %374 = vmatpush.bf16.msra.mxu0 %v323
      %375 = vmatpush.bf16.msra.mxu0 %v322
      %376 = vmatpush.bf16.msra.mxu0 %v321
      %377 = vmatmul.bf16.gmra.mxu0 %v259
      %v378 = vpop.f32.mrf.mxu0
      %v379 = vadd.f32 %v209, %v378
      %v380 = vpop.f32.mrf.mxu0
      %v381 = vadd.f32 %v209, %v380
      %382 = vmatmul.bf16.gmra.mxu0 %v261
      %v383 = vpop.f32.mrf.mxu0
      %v384 = vadd.f32 %v209, %v383
      %v385 = vpop.f32.mrf.mxu0
      %v386 = vadd.f32 %v209, %v385
      %387 = vmatmul.bf16.gmra.mxu0 %v263
      %v388 = vpop.f32.mrf.mxu0
      %v389 = vadd.f32 %v209, %v388
      %v390 = vpop.f32.mrf.mxu0
      %v391 = vadd.f32 %v209, %v390
      %392 = vmatmul.bf16.gmra.mxu0 %v265
      %v393 = vpop.f32.mrf.mxu0
      %v394 = vadd.f32 %v209, %v393
      %v395 = vpop.f32.mrf.mxu0
      %v396 = vadd.f32 %v209, %v395
      %397 = vmatmul.bf16.gmra.mxu0 %v267
      %v398 = vpop.f32.mrf.mxu0
      %v399 = vadd.f32 %v209, %v398
      %v400 = vpop.f32.mrf.mxu0
      %v401 = vadd.f32 %v209, %v400
      %402 = vmatmul.bf16.gmra.mxu0 %v269
      %v403 = vpop.f32.mrf.mxu0
      %v404 = vadd.f32 %v209, %v403
      %v405 = vpop.f32.mrf.mxu0
      %v406 = vadd.f32 %v209, %v405
      %407 = vmatmul.bf16.gmra.mxu0 %v271
      %v408 = vpop.f32.mrf.mxu0
      %v409 = vadd.f32 %v209, %v408
      %v410 = vpop.f32.mrf.mxu0
      %v411 = vadd.f32 %v209, %v410
      %412 = vmatmul.bf16.gmra.mxu0 %v273
      %v413 = vpop.f32.mrf.mxu0
      %v414 = vadd.f32 %v209, %v413
      %v415 = vpop.f32.mrf.mxu0
      %v416 = vadd.f32 %v209, %v415
      %417 = vdwg.mxu0
      %418 = vmatpush.bf16.msra.mxu0 0
      %419 = vmatpush.bf16.msra.mxu0 0
      %420 = vmatpush.bf16.msra.mxu0 0
      %421 = vmatpush.bf16.msra.mxu0 0
      %422 = vmatpush.bf16.msra.mxu0 0
      %423 = vmatpush.bf16.msra.mxu0 0
      %424 = vmatpush.bf16.msra.mxu0 %v367
      %425 = vmatpush.bf16.msra.mxu0 %v329
      %426 = vmatmul.bf16.gmra.mxu0 %v342
      %v427 = vpop.f32.mrf.mxu0
      %v428 = vadd.f32 %v379, %v427
      %v429 = vpop.f32.mrf.mxu0
      %v430 = vadd.f32 %v381, %v429
      %431 = vmatmul.bf16.gmra.mxu0 %v345
      %v432 = vpop.f32.mrf.mxu0
      %v433 = vadd.f32 %v384, %v432
      %v434 = vpop.f32.mrf.mxu0
      %v435 = vadd.f32 %v386, %v434
      %436 = vmatmul.bf16.gmra.mxu0 %v348
      %v437 = vpop.f32.mrf.mxu0
      %v438 = vadd.f32 %v389, %v437
      %v439 = vpop.f32.mrf.mxu0
      %v440 = vadd.f32 %v391, %v439
      %441 = vmatmul.bf16.gmra.mxu0 %v351
      %v442 = vpop.f32.mrf.mxu0
      %v443 = vadd.f32 %v394, %v442
      %v444 = vpop.f32.mrf.mxu0
      %v445 = vadd.f32 %v396, %v444
      %446 = vmatmul.bf16.gmra.mxu0 %v354
      %v447 = vpop.f32.mrf.mxu0
      %v448 = vadd.f32 %v399, %v447
      %v449 = vpop.f32.mrf.mxu0
      %v450 = vadd.f32 %v401, %v449
      %451 = vmatmul.bf16.gmra.mxu0 %v357
      %v452 = vpop.f32.mrf.mxu0
      %v453 = vadd.f32 %v404, %v452
      %v454 = vpop.f32.mrf.mxu0
      %v455 = vadd.f32 %v406, %v454
      %456 = vmatmul.bf16.gmra.mxu0 %v360
      %v457 = vpop.f32.mrf.mxu0
      %v458 = vadd.f32 %v409, %v457
      %v459 = vpop.f32.mrf.mxu0
      %v460 = vadd.f32 %v411, %v459
      %461 = vmatmul.bf16.gmra.mxu0 %v363
      %v462 = vpop.f32.mrf.mxu0
      %v463 = vadd.f32 %v414, %v462
      %v464 = vpop.f32.mrf.mxu0
      %v465 = vadd.f32 %v416, %v464
      %466 = vdwg.mxu0
      %v467 = vmax.f32 %v428, %v438
      %v468 = vmax.f32 %v430, %v440
      %v469 = vmax.f32 %v433, %v443
      %v470 = vmax.f32 %v435, %v445
      %v471 = vmax.f32 %v448, %v458
      %v472 = vmax.f32 %v450, %v460
      %v473 = vmax.f32 %v453, %v463
      %v474 = vmax.f32 %v455, %v465
      %v475 = vmax.f32 %v467, %v471
      %v476 = vmax.f32 %v468, %v472
      %v477 = vmax.f32 %v469, %v473
      %v478 = vmax.f32 %v470, %v474
      %479 = vst [vmem:[%s170] sm:$0xff] %v475
      %480 = vst [vmem:[%s170 + $0x8] sm:$0xff] %v476
      %481 = vst [vmem:[%s170 + $0x10] sm:$0xff] %v477
      %482 = vst [vmem:[%s170 + $0x18] sm:$0xff] %v478
      %p483 = scmp.lt.s32.totalorder %s14, 1
      %s484 = scalar_select %p483, %s14, 1
      %s485 = smul.addr %s484, 4
      %s486 = smul.addr %s485, 8
      %s487 = scalar_lea.vmem %s3, %s486
      // Predicated region
      $region33: #{lenet_forward.4} parent=31 // pred_check
        %p488 = pneg %p100
      $region34: #{lenet_forward.4} parent=31 // pred_check_branch
        %490 = sbr.rel (%p488) target = $region36
      $region35: #{lenet_forward.4} parent=31 // pred_region
        _
      $region36: #{lenet_forward.4} parent=31 // pred_fallthru
        _
    $region32: #{lenet_forward.4} parent=5 // pred_fallthru
      _
    %p491 = scmp.le.s32.totalorder 2, %s9
    // Predicated region
    $region37: #{lenet_forward.4} parent=5 // pred_check
      %p492 = pneg %p491
    $region38: #{lenet_forward.4} parent=5 // pred_check_branch
      %494 = sbr.rel (%p492) target = $region40
    $region39: #{lenet_forward.4} parent=5 // pred_region
      %s495 = ssub.s32 %s9, 2
      // Predicated region
      $region41: #{lenet_forward.4} parent=39 // pred_check
        %p496 = pneg %p106
      $region42: #{lenet_forward.4} parent=39 // pred_check_branch
        %498 = sbr.rel (%p496) target = $region44
      $region43: #{lenet_forward.4} parent=39 // pred_region
        %p499 = scmp.lt.s32.totalorder %s15, 1
        %s500 = scalar_select %p499, %s15, 1
        %s501 = smul.addr %s500, 4
        %s502 = smul.addr %s501, 8
        %s503 = scalar_lea.vmem %s3, %s502
      $region44: #{lenet_forward.4} parent=39 // pred_fallthru
        _
    $region40: #{lenet_forward.4} parent=5 // pred_fallthru
      _
  $region6: #{lenet_forward.4} parent=0 // loop_footer
    %s13 = sadd.s32 1, %s9
  $region7: #{lenet_forward.4} parent=0 // loop_footer_branch
    %8 = sbr.rel target = $region3
  $region8: #{lenet_forward.4} parent=0 // loop_exit
    _

// kernel: lenet_forward.5
$region0: #{lenet_forward.5}
  #allocation0 [shape = 'u32[]', space=smem, size = 0x4, offset = 0x4, fixed_abs, tag = 'smem constant byte address 0x4 - core index']
  #allocation1 [shape = 'u32[72,128]{1,0:T(1,128)}', space=vmem, size = 0x9000, scoped, tag = 'internal scratch']
  %s0 = inlined_call_operand.vmem [shape: bf16[2,400], index: 0, kind: input, shape index: {}]
  %s1 = inlined_call_operand.vmem [shape: bf16[400,128], index: 1, kind: input, shape index: {}]
  %s2 = inlined_call_operand.vmem [shape: f32[1,128], index: 2, kind: input, shape index: {}]
  %s3 = inlined_call_operand.vmem [shape: bf16[128,128], index: 3, kind: input, shape index: {}]
  %s4 = inlined_call_operand.vmem [shape: f32[1,128], index: 4, kind: input, shape index: {}]
  %s5 = inlined_call_operand.vmem [shape: bf16[128,128], index: 5, kind: input, shape index: {}]
  %s6 = inlined_call_operand.vmem [shape: f32[1,128], index: 6, kind: input, shape index: {}]
  %s7 = inlined_call_operand.hbm [shape: f32[2,128], index: 7, kind: output, shape index: {}]
  %s8 = sld [smem:[#allocation0]]
  $region38: #{lenet_forward.5} parent=0
    _
  %s10 = ssub.s32 1, %s8
  %s11 = scalar_select 0, %s10, %s8
  $region1: #{lenet_forward.5} parent=0
    #allocation2 [shape = 'u8[1024]{0}', space=vmem, size = 0x400, scoped, tag = 'output window, operand 0, single buffered']
    #allocation3 [shape = 's32[1]{0}', space=sflag, size = 0x4, scoped, tag = 'scoped memory for lenet_forward.5']
    %12 = vsyncpa [#allocation3], 0
    // Predicated region
    $region2: #{lenet_forward.5} parent=1 // pred_check
      _
    $region3: #{lenet_forward.5} parent=1 // pred_check_branch
      %14 = sbr.rel (0) target = $region5
    $region4: #{lenet_forward.5} parent=1 // pred_region
      _
    $region5: #{lenet_forward.5} parent=1 // pred_fallthru
      _
    // Predicated region
    $region6: #{lenet_forward.5} parent=1 // pred_check
      _
    $region7: #{lenet_forward.5} parent=1 // pred_check_branch
      %16 = sbr.rel (0) target = $region9
    $region8: #{lenet_forward.5} parent=1 // pred_region
      _
    $region9: #{lenet_forward.5} parent=1 // pred_fallthru
      _
    // Predicated region
    $region10: #{lenet_forward.5} parent=1 // pred_check
      _
    $region11: #{lenet_forward.5} parent=1 // pred_check_branch
      %18 = sbr.rel (0) target = $region13
    $region12: #{lenet_forward.5} parent=1 // pred_region
      _
    $region13: #{lenet_forward.5} parent=1 // pred_fallthru
      _
    // Predicated region
    $region14: #{lenet_forward.5} parent=1 // pred_check
      _
    $region15: #{lenet_forward.5} parent=1 // pred_check_branch
      %20 = sbr.rel (0) target = $region17
    $region16: #{lenet_forward.5} parent=1 // pred_region
      _
    $region17: #{lenet_forward.5} parent=1 // pred_fallthru
      _
    // Predicated region
    $region18: #{lenet_forward.5} parent=1 // pred_check
      _
    $region19: #{lenet_forward.5} parent=1 // pred_check_branch
      %22 = sbr.rel (0) target = $region21
    $region20: #{lenet_forward.5} parent=1 // pred_region
      _
    $region21: #{lenet_forward.5} parent=1 // pred_fallthru
      _
    // Predicated region
    $region22: #{lenet_forward.5} parent=1 // pred_check
      _
    $region23: #{lenet_forward.5} parent=1 // pred_check_branch
      %24 = sbr.rel (0) target = $region25
    $region24: #{lenet_forward.5} parent=1 // pred_region
      _
    $region25: #{lenet_forward.5} parent=1 // pred_fallthru
      _
    // Predicated region
    $region26: #{lenet_forward.5} parent=1 // pred_check
      _
    $region27: #{lenet_forward.5} parent=1 // pred_check_branch
      %26 = sbr.rel (0) target = $region29
    $region28: #{lenet_forward.5} parent=1 // pred_region
      _
    $region29: #{lenet_forward.5} parent=1 // pred_fallthru
      _
    %v28 = vld [vmem:[%s0] sm:$0xf]
    %v29 = vld [vmem:[%s1] sm:$0xf]
    %v30 = vld [vmem:[%s1 + $0x4] sm:$0xf]
    %v31 = vld [vmem:[%s1 + $0x8] sm:$0xf]
    %v32 = vld [vmem:[%s1 + $0xc] sm:$0xf]
    %v33 = vld [vmem:[%s1 + $0x10] sm:$0xf]
    %v34 = vld [vmem:[%s1 + $0x14] sm:$0xf]
    %v35 = vld [vmem:[%s1 + $0x18] sm:$0xf]
    %v36 = vld [vmem:[%s1 + $0x1c] sm:$0xf]
    %v37 = vld [vmem:[%s1 + $0x20] sm:$0xf]
    %v38 = vld [vmem:[%s1 + $0x24] sm:$0xf]
    %v39 = vld [vmem:[%s1 + $0x28] sm:$0xf]
    %v40 = vld [vmem:[%s1 + $0x2c] sm:$0xf]
    %v41 = vld [vmem:[%s1 + $0x30] sm:$0xf]
    %v42 = vld [vmem:[%s1 + $0x34] sm:$0xf]
    %v43 = vld [vmem:[%s1 + $0x38] sm:$0xf]
    %v44 = vld [vmem:[%s1 + $0x3c] sm:$0xf]
    %v45 = vld [vmem:[%s1 + $0x40] sm:$0xf]
    %v46 = vld [vmem:[%s1 + $0x44] sm:$0xf]
    %v47 = vld [vmem:[%s1 + $0x48] sm:$0xf]
    %v48 = vld [vmem:[%s1 + $0x4c] sm:$0xf]
    %v49 = vld [vmem:[%s1 + $0x50] sm:$0xf]
    %v50 = vld [vmem:[%s1 + $0x54] sm:$0xf]
    %v51 = vld [vmem:[%s1 + $0x58] sm:$0xf]
    %v52 = vld [vmem:[%s1 + $0x5c] sm:$0xf]
    %v53 = vld [vmem:[%s1 + $0x60] sm:$0xf]
    %v54 = vld [vmem:[%s1 + $0x64] sm:$0xf]
    %v55 = vld [vmem:[%s1 + $0x68] sm:$0xf]
    %v56 = vld [vmem:[%s1 + $0x6c] sm:$0xf]
    %v57 = vld [vmem:[%s1 + $0x70] sm:$0xf]
    %v58 = vld [vmem:[%s1 + $0x74] sm:$0xf]
    %v59 = vld [vmem:[%s1 + $0x78] sm:$0xf]
    %v60 = vld [vmem:[%s1 + $0x7c] sm:$0xf]
    %v61 = vld [vmem:[%s1 + $0x80] sm:$0xf]
    %v62 = vld [vmem:[%s1 + $0x84] sm:$0xf]
    %v63 = vld [vmem:[%s1 + $0x88] sm:$0xf]
    %v64 = vld [vmem:[%s1 + $0x8c] sm:$0xf]
    %v65 = vld [vmem:[%s1 + $0x90] sm:$0xf]
    %v66 = vld [vmem:[%s1 + $0x94] sm:$0xf]
    %v67 = vld [vmem:[%s1 + $0x98] sm:$0xf]
    %v68 = vld [vmem:[%s1 + $0x9c] sm:$0xf]
    %v69 = vld [vmem:[%s1 + $0xa0] sm:$0xf]
    %v70 = vld [vmem:[%s1 + $0xa4] sm:$0xf]
    %v71 = vld [vmem:[%s1 + $0xa8] sm:$0xf]
    %v72 = vld [vmem:[%s1 + $0xac] sm:$0xf]
    %v73 = vld [vmem:[%s1 + $0xb0] sm:$0xf]
    %v74 = vld [vmem:[%s1 + $0xb4] sm:$0xf]
    %v75 = vld [vmem:[%s1 + $0xb8] sm:$0xf]
    %v76 = vld [vmem:[%s1 + $0xbc] sm:$0xf]
    %v77 = vld [vmem:[%s1 + $0xc0] sm:$0xf]
    %v78 = vld [vmem:[%s1 + $0xc4] sm:$0xf]
    %v79 = vld [vmem:[%s2] sm:$0x1]
    %v81 = vperm.slane %v79, 0
    %84 = vst [vmem:[#allocation1] ss:$9 sm:$0xff] %v28
    %v85 = vld [vmem:[#allocation1] sm:$0xff]
    %v86 = vld [vmem:[#allocation1 + $0x9] sm:$0xff]
    %v87 = vld [vmem:[#allocation1 + $0x12] sm:$0xff]
    %v88 = vld [vmem:[#allocation1 + $0x1b] sm:$0xff]
    %v142 = vunpack.c.l.b16 %v29
    %v143 = vunpack.c.l.b16 %v30
    %v144 = vunpack.c.l.b16 %v31
    %v145 = vunpack.c.l.b16 %v32
    %v146 = vunpack.c.l.b16 %v33
    %v147 = vunpack.c.l.b16 %v34
    %v148 = vunpack.c.l.b16 %v35
    %v149 = vunpack.c.l.b16 %v36
    %v150 = vunpack.c.l.b16 %v37
    %v151 = vunpack.c.l.b16 %v38
    %v152 = vunpack.c.l.b16 %v39
    %v153 = vunpack.c.l.b16 %v40
    %v154 = vunpack.c.l.b16 %v41
    %v155 = vunpack.c.l.b16 %v42
    %v156 = vunpack.c.l.b16 %v43
    %v157 = vunpack.c.l.b16 %v44
    %v158 = vunpack.c.l.b16 %v45
    %v159 = vunpack.c.l.b16 %v46
    %v160 = vunpack.c.l.b16 %v47
    %v161 = vunpack.c.l.b16 %v48
    %v162 = vunpack.c.l.b16 %v49
    %v163 = vunpack.c.l.b16 %v50
    %v164 = vunpack.c.l.b16 %v51
    %v165 = vunpack.c.l.b16 %v52
    %v166 = vunpack.c.l.b16 %v53
    %v167 = vunpack.c.l.b16 %v54
    %v168 = vunpack.c.l.b16 %v55
    %v169 = vunpack.c.l.b16 %v56
    %v170 = vunpack.c.l.b16 %v57
    %v171 = vunpack.c.l.b16 %v58
    %v172 = vunpack.c.l.b16 %v59
    %v173 = vunpack.c.l.b16 %v60
    %v174 = vunpack.c.l.b16 %v61
    %v175 = vunpack.c.l.b16 %v62
    %v176 = vunpack.c.l.b16 %v63
    %v177 = vunpack.c.l.b16 %v64
    %v178 = vunpack.c.l.b16 %v65
    %v179 = vunpack.c.l.b16 %v66
    %v180 = vunpack.c.l.b16 %v67
    %v181 = vunpack.c.l.b16 %v68
    %v182 = vunpack.c.l.b16 %v69
    %v183 = vunpack.c.l.b16 %v70
    %v184 = vunpack.c.l.b16 %v71
    %v185 = vunpack.c.l.b16 %v72
    %v186 = vunpack.c.l.b16 %v73
    %v187 = vunpack.c.l.b16 %v74
    %v188 = vunpack.c.l.b16 %v75
    %v189 = vunpack.c.l.b16 %v76
    %v190 = vunpack.c.l.b16 %v77
    %v191 = vunpack.c.l.b16 %v78
    %v192 = vpack.c.b16 %v143, %v142
    %v193 = vpack.c.b16 %v145, %v144
    %v194 = vpack.c.b16 %v147, %v146
    %v195 = vpack.c.b16 %v149, %v148
    %v196 = vpack.c.b16 %v151, %v150
    %v197 = vpack.c.b16 %v153, %v152
    %v198 = vpack.c.b16 %v155, %v154
    %v199 = vpack.c.b16 %v157, %v156
    %v200 = vpack.c.b16 %v159, %v158
    %v201 = vpack.c.b16 %v161, %v160
    %v202 = vpack.c.b16 %v163, %v162
    %v203 = vpack.c.b16 %v165, %v164
    %v204 = vpack.c.b16 %v167, %v166
    %v205 = vpack.c.b16 %v169, %v168
    %v206 = vpack.c.b16 %v171, %v170
    %v207 = vpack.c.b16 %v173, %v172
    %v208 = vpack.c.b16 %v175, %v174
    %v209 = vpack.c.b16 %v177, %v176
    %v210 = vpack.c.b16 %v179, %v178
    %v211 = vpack.c.b16 %v181, %v180
    %v212 = vpack.c.b16 %v183, %v182
    %v213 = vpack.c.b16 %v185, %v184
    %v214 = vpack.c.b16 %v187, %v186
    %v215 = vpack.c.b16 %v189, %v188
    %v216 = vpack.c.b16 %v191, %v190
    %vm242 = vcmask 130048
    %v243 = vsel %vm242, %v88, 0
    %245 = vmatpush.bf16.msra.mxu0 %v199
    %246 = vmatpush.bf16.msra.mxu0 %v198
    %247 = vmatpush.bf16.msra.mxu0 %v197
    %248 = vmatpush.bf16.msra.mxu0 %v196
    %249 = vmatpush.bf16.msra.mxu0 %v195
    %250 = vmatpush.bf16.msra.mxu0 %v194
    %251 = vmatpush.bf16.msra.mxu0 %v193
    %252 = vmatpush.bf16.msra.mxu0 %v192
    %253 = vmatmul.bf16.gmra.mxu0 %v85
    %v254 = vpop.f32.mrf.mxu0
    %v255 = vadd.f32 %v81, %v254
    %v256 = vpop.f32.mrf.mxu0
    %257 = vdwg.mxu0
    %258 = vmatpush.bf16.msra.mxu0 %v207
    %259 = vmatpush.bf16.msra.mxu0 %v206
    %260 = vmatpush.bf16.msra.mxu0 %v205
    %261 = vmatpush.bf16.msra.mxu0 %v204
    %262 = vmatpush.bf16.msra.mxu0 %v203
    %263 = vmatpush.bf16.msra.mxu0 %v202
    %264 = vmatpush.bf16.msra.mxu0 %v201
    %265 = vmatpush.bf16.msra.mxu0 %v200
    %266 = vmatmul.bf16.gmra.mxu0 %v86
    %v267 = vpop.f32.mrf.mxu0
    %v268 = vadd.f32 %v255, %v267
    %v269 = vpop.f32.mrf.mxu0
    %270 = vdwg.mxu0
    %271 = vmatpush.bf16.msra.mxu0 %v215
    %272 = vmatpush.bf16.msra.mxu0 %v214
    %273 = vmatpush.bf16.msra.mxu0 %v213
    %274 = vmatpush.bf16.msra.mxu0 %v212
    %275 = vmatpush.bf16.msra.mxu0 %v211
    %276 = vmatpush.bf16.msra.mxu0 %v210
    %277 = vmatpush.bf16.msra.mxu0 %v209
    %278 = vmatpush.bf16.msra.mxu0 %v208
    %279 = vmatmul.bf16.gmra.mxu0 %v87
    %v280 = vpop.f32.mrf.mxu0
    %v281 = vadd.f32 %v268, %v280
    %v282 = vpop.f32.mrf.mxu0
    %283 = vdwg.mxu0
    %284 = vmatpush.bf16.msra.mxu0 0
    %285 = vmatpush.bf16.msra.mxu0 0
    %286 = vmatpush.bf16.msra.mxu0 0
    %287 = vmatpush.bf16.msra.mxu0 0
    %288 = vmatpush.bf16.msra.mxu0 0
    %289 = vmatpush.bf16.msra.mxu0 0
    %290 = vmatpush.bf16.msra.mxu0 0
    %291 = vmatpush.bf16.msra.mxu0 %v216
    %292 = vmatmul.bf16.gmra.mxu0 %v243
    %v293 = vpop.f32.mrf.mxu0
    %v294 = vadd.f32 %v281, %v293
    %v295 = vpop.f32.mrf.mxu0
    %296 = vdwg.mxu0
    %v297 = vpack.c.bf16 %v294, %v294
    %v298 = vld [vmem:[%s3] sm:$0xf]
    %v299 = vld [vmem:[%s3 + $0x4] sm:$0xf]
    %v300 = vld [vmem:[%s3 + $0x8] sm:$0xf]
    %v301 = vld [vmem:[%s3 + $0xc] sm:$0xf]
    %v302 = vld [vmem:[%s3 + $0x10] sm:$0xf]
    %v303 = vld [vmem:[%s3 + $0x14] sm:$0xf]
    %v304 = vld [vmem:[%s3 + $0x18] sm:$0xf]
    %v305 = vld [vmem:[%s3 + $0x1c] sm:$0xf]
    %v306 = vld [vmem:[%s3 + $0x20] sm:$0xf]
    %v307 = vld [vmem:[%s3 + $0x24] sm:$0xf]
    %v308 = vld [vmem:[%s3 + $0x28] sm:$0xf]
    %v309 = vld [vmem:[%s3 + $0x2c] sm:$0xf]
    %v310 = vld [vmem:[%s3 + $0x30] sm:$0xf]
    %v311 = vld [vmem:[%s3 + $0x34] sm:$0xf]
    %v312 = vld [vmem:[%s3 + $0x38] sm:$0xf]
    %v313 = vld [vmem:[%s3 + $0x3c] sm:$0xf]
    %v314 = vld [vmem:[%s4] sm:$0x1]
    %v316 = vperm.slane %v314, 0
    %v334 = vunpack.c.l.b16 %v298
    %v335 = vunpack.c.l.b16 %v299
    %v336 = vunpack.c.l.b16 %v300
    %v337 = vunpack.c.l.b16 %v301
    %v338 = vunpack.c.l.b16 %v302
    %v339 = vunpack.c.l.b16 %v303
    %v340 = vunpack.c.l.b16 %v304
    %v341 = vunpack.c.l.b16 %v305
    %v342 = vunpack.c.l.b16 %v306
    %v343 = vunpack.c.l.b16 %v307
    %v344 = vunpack.c.l.b16 %v308
    %v345 = vunpack.c.l.b16 %v309
    %v346 = vunpack.c.l.b16 %v310
    %v347 = vunpack.c.l.b16 %v311
    %v348 = vunpack.c.l.b16 %v312
    %v349 = vunpack.c.l.b16 %v313
    %v350 = vpack.c.b16 %v335, %v334
    %v351 = vpack.c.b16 %v337, %v336
    %v352 = vpack.c.b16 %v339, %v338
    %v353 = vpack.c.b16 %v341, %v340
    %v354 = vpack.c.b16 %v343, %v342
    %v355 = vpack.c.b16 %v345, %v344
    %v356 = vpack.c.b16 %v347, %v346
    %v357 = vpack.c.b16 %v349, %v348
    %366 = vmatpush.bf16.msra.mxu0 %v357
    %367 = vmatpush.bf16.msra.mxu0 %v356
    %368 = vmatpush.bf16.msra.mxu0 %v355
    %369 = vmatpush.bf16.msra.mxu0 %v354
    %370 = vmatpush.bf16.msra.mxu0 %v353
    %371 = vmatpush.bf16.msra.mxu0 %v352
    %372 = vmatpush.bf16.msra.mxu0 %v351
    %373 = vmatpush.bf16.msra.mxu0 %v350
    %374 = vmatmul.bf16.gmra.mxu0 %v297
    %v375 = vpop.f32.mrf.mxu0
    %v376 = vadd.f32 %v316, %v375
    %v377 = vpop.f32.mrf.mxu0
    %378 = vdwg.mxu0
    %v379 = vpack.c.bf16 %v376, %v376
    %v380 = vld [vmem:[%s5] sm:$0xf]
    %v381 = vld [vmem:[%s5 + $0x4] sm:$0xf]
    %v382 = vld [vmem:[%s5 + $0x8] sm:$0xf]
    %v383 = vld [vmem:[%s5 + $0xc] sm:$0xf]
    %v384 = vld [vmem:[%s5 + $0x10] sm:$0xf]
    %v385 = vld [vmem:[%s5 + $0x14] sm:$0xf]
    %v386 = vld [vmem:[%s5 + $0x18] sm:$0xf]
    %v387 = vld [vmem:[%s5 + $0x1c] sm:$0xf]
    %v388 = vld [vmem:[%s5 + $0x20] sm:$0xf]
    %v389 = vld [vmem:[%s5 + $0x24] sm:$0xf]
    %v390 = vld [vmem:[%s5 + $0x28] sm:$0xf]
    %v391 = vld [vmem:[%s5 + $0x2c] sm:$0xf]
    %v392 = vld [vmem:[%s5 + $0x30] sm:$0xf]
    %v393 = vld [vmem:[%s5 + $0x34] sm:$0xf]
    %v394 = vld [vmem:[%s5 + $0x38] sm:$0xf]
    %v395 = vld [vmem:[%s5 + $0x3c] sm:$0xf]
    %v396 = vld [vmem:[%s6] sm:$0x1]
    %v398 = vperm.slane %v396, 0
    %v416 = vunpack.c.l.b16 %v380
    %v417 = vunpack.c.l.b16 %v381
    %v418 = vunpack.c.l.b16 %v382
    %v419 = vunpack.c.l.b16 %v383
    %v420 = vunpack.c.l.b16 %v384
    %v421 = vunpack.c.l.b16 %v385
    %v422 = vunpack.c.l.b16 %v386
    %v423 = vunpack.c.l.b16 %v387
    %v424 = vunpack.c.l.b16 %v388
    %v425 = vunpack.c.l.b16 %v389
    %v426 = vunpack.c.l.b16 %v390
    %v427 = vunpack.c.l.b16 %v391
    %v428 = vunpack.c.l.b16 %v392
    %v429 = vunpack.c.l.b16 %v393
    %v430 = vunpack.c.l.b16 %v394
    %v431 = vunpack.c.l.b16 %v395
    %v432 = vpack.c.b16 %v417, %v416
    %v433 = vpack.c.b16 %v419, %v418
    %v434 = vpack.c.b16 %v421, %v420
    %v435 = vpack.c.b16 %v423, %v422
    %v436 = vpack.c.b16 %v425, %v424
    %v437 = vpack.c.b16 %v427, %v426
    %v438 = vpack.c.b16 %v429, %v428
    %v439 = vpack.c.b16 %v431, %v430
    %448 = vmatpush.bf16.msra.mxu0 %v439
    %449 = vmatpush.bf16.msra.mxu0 %v438
    %450 = vmatpush.bf16.msra.mxu0 %v437
    %451 = vmatpush.bf16.msra.mxu0 %v436
    %452 = vmatpush.bf16.msra.mxu0 %v435
    %453 = vmatpush.bf16.msra.mxu0 %v434
    %454 = vmatpush.bf16.msra.mxu0 %v433
    %455 = vmatpush.bf16.msra.mxu0 %v432
    %456 = vmatmul.bf16.gmra.mxu0 %v379
    %v457 = vpop.f32.mrf.mxu0
    %v458 = vadd.f32 %v398, %v457
    %v459 = vpop.f32.mrf.mxu0
    %460 = vdwg.mxu0
    %461 = vst [vmem:[#allocation2] sm:$0x3] %v458
    // Predicated region
    $region30: #{lenet_forward.5} parent=1 // pred_check
      _
    $region31: #{lenet_forward.5} parent=1 // pred_check_branch
      %463 = sbr.rel (0) target = $region33
    $region32: #{lenet_forward.5} parent=1 // pred_region
      %465 = vsyncadd [#allocation3], 0
      %s467 = sshll.u32 [#allocation2], 4
      %s468 = int_to_ptr.vmem [resolvable:$true] %s467
      %s469 = sshll.u32 %s7, 4
      %s470 = int_to_ptr.hbm [resolvable:$true] %s469
      %472 = dma.vmem_to_hbm [thread:$0]  %s468, 32, %s470, [#allocation3]
    $region33: #{lenet_forward.5} parent=1 // pred_fallthru
      _
    // Predicated region
    $region34: #{lenet_forward.5} parent=1 // pred_check
      _
    $region35: #{lenet_forward.5} parent=1 // pred_check_branch
      %474 = sbr.rel (0) target = $region37
    $region36: #{lenet_forward.5} parent=1 // pred_region
      %476 = dma.done [#allocation3], 32
    $region37: #{lenet_forward.5} parent=1 // pred_fallthru
      _
    %477 = vsyncpa [#allocation3], 1

</llo_original>
